<compile_context>
chip_gen: v6e
topology: v6e:2x2x1
jax: 0.10.0
libtpu: 0.0.40
codegen_flags: <defaults>
</compile_context>

<pallas_src>
import functools

import jax
import jax.numpy as jnp
from jax.experimental import pallas as pl
from jax.experimental.pallas import tpu as pltpu


_VMEM_LIMIT = 32 * 1024 * 1024   # explicit scoped-VMEM budget (fits v7x 64 MiB)


# ----------------------------------------------------------------------------
# Pallas kernels
# ----------------------------------------------------------------------------
def _conv3x3_rows(xpad_ref, bw_ref, y_ref, stats_ref, H):
    """3x3 same-conv on lane-dense rows: 3 banded matmuls + packed BN stats.

    xpad_ref : (H+2, W*Cin) f32 VMEM scratch; rows 0 and H+1 are the zero halo.
    bw_ref   : (3, W*Cin, W*Cout) bf16 banded weights (w zero-padding is folded
               into the band structure, so no lane halo is needed).
    """
    slab = xpad_ref[pl.ds(0, H), :].astype(jnp.bfloat16)
    acc = jnp.dot(slab, bw_ref[0], preferred_element_type=jnp.float32)
    for kh in (1, 2):
        slab = xpad_ref[pl.ds(kh, H), :].astype(jnp.bfloat16)
        acc = acc + jnp.dot(slab, bw_ref[kh], preferred_element_type=jnp.float32)

    # Lane-dense bf16 activation writeout (W*Cout = 128 -> unmasked stores).
    y_ref[0] = acc.astype(y_ref.dtype)

    # Packed per-image BN partial stats (per-lane sum / sum-of-squares); the
    # W replication and the batch axis are reduced in JAX glue so the batch
    # grid axis stays "parallel" (megacore-friendly).
    s = jnp.sum(acc, axis=0, keepdims=True)
    ss = jnp.sum(acc * acc, axis=0, keepdims=True)
    stats_ref[0] = jnp.concatenate([s, ss], axis=0)


def concat_resize_conv_kernel(x1_ref, x2_ref, mh_ref, mwc_ref, bw_ref,
                              y_ref, stats_ref, xpad_ref):
    """cb1.conv1: fused bilinear resize of x1 + channel concat + 3x3 conv."""
    H = x2_ref.shape[1]
    WC1 = mwc_ref.shape[1]
    WC2 = x2_ref.shape[2]
    lanes = xpad_ref.shape[1]

    # Zero only the 1-row top/bottom halo; interior rows are overwritten below.
    zero_row = jnp.zeros((1, lanes), xpad_ref.dtype)
    xpad_ref[pl.ds(0, 1), :] = zero_row
    xpad_ref[pl.ds(H + 1, 1), :] = zero_row

    # Bilinear resize (align_corners=True) as two small MXU matmuls.  The W
    # interpolation matrix is pre-expanded to kron(Mw^T, I_C1) so the lane
    # layout (w*C1 + c) is preserved with no in-kernel reshape / transpose.
    x1 = x1_ref[0].astype(jnp.bfloat16)                              # (H1, W1*C1)
    tmp = jnp.dot(mh_ref[...], x1, preferred_element_type=jnp.float32)
    x1r = jnp.dot(tmp.astype(jnp.bfloat16), mwc_ref[...],
                  preferred_element_type=jnp.float32)                # (H, W*C1)

    # torch.cat([x1r, x2], dim=channel) as two lane-offset writes; x2 lands at
    # lane offset W*C1 (a multiple of 128 here -> aligned store).
    xpad_ref[pl.ds(1, H), pl.ds(0, WC1)] = x1r
    xpad_ref[pl.ds(1, H), pl.ds(WC1, WC2)] = x2_ref[0]

    _conv3x3_rows(xpad_ref, bw_ref, y_ref, stats_ref, H)


def bn_conv_kernel(x_ref, scale_ref, shift_ref, bw_ref,
                   y_ref, stats_ref, xpad_ref, *, prelu):
    """Fused: previous layer's BN affine (+ optional ReLU) -> 3x3 conv + stats."""
    H = x_ref.shape[1]
    lanes = xpad_ref.shape[1]

    zero_row = jnp.zeros((1, lanes), xpad_ref.dtype)
    xpad_ref[pl.ds(0, 1), :] = zero_row
    xpad_ref[pl.ds(H + 1, 1), :] = zero_row

    x = x_ref[0].astype(jnp.float32) * scale_ref[...] + shift_ref[...]
    if prelu:
        x = jnp.maximum(x, 0.0)
    xpad_ref[pl.ds(1, H), :] = x

    _conv3x3_rows(xpad_ref, bw_ref, y_ref, stats_ref, H)


def bn_lanedense_kernel(y_ref, scale_ref, shift_ref, o_ref):
    """Final BN affine on lane-dense (rows, W*C) tiles."""
    o_ref[...] = y_ref[...].astype(jnp.float32) * scale_ref[...] + shift_ref[...]


# ----------------------------------------------------------------------------
# pallas_call wrappers
# ----------------------------------------------------------------------------
def _conv_outputs(N, H, WCout):
    shapes = (jax.ShapeDtypeStruct((N, H, WCout), jnp.bfloat16),
              jax.ShapeDtypeStruct((N, 2, WCout), jnp.float32))
    specs = (pl.BlockSpec((1, H, WCout), lambda n: (n, 0, 0)),
             pl.BlockSpec((1, 2, WCout), lambda n: (n, 0, 0)))
    return shapes, specs


def concat_resize_conv(x1_slab, x2_slab, mh, mwc, bw_cat):
    N, H1, W1C1 = x1_slab.shape
    _, H, WC2 = x2_slab.shape
    WC1 = mwc.shape[1]
    WCout = bw_cat.shape[2]
    out_shapes, out_specs = _conv_outputs(N, H, WCout)
    return pl.pallas_call(
        concat_resize_conv_kernel,
        out_shape=out_shapes,
        grid=(N,),
        in_specs=[
            pl.BlockSpec((1, H1, W1C1), lambda n: (n, 0, 0)),
            pl.BlockSpec((1, H, WC2), lambda n: (n, 0, 0)),
            pl.BlockSpec((H, H1), lambda n: (0, 0)),
            pl.BlockSpec((W1C1, WC1), lambda n: (0, 0)),
            pl.BlockSpec((3, WC1 + WC2, WCout), lambda n: (0, 0, 0)),
        ],
        out_specs=out_specs,
        scratch_shapes=[pltpu.VMEM((H + 2, WC1 + WC2), jnp.float32)],
        compiler_params=pltpu.CompilerParams(
            dimension_semantics=("parallel",),
            vmem_limit_bytes=_VMEM_LIMIT),
    )(x1_slab, x2_slab, mh, mwc, bw_cat)


def bn_conv(x_slab, scale_row, shift_row, bw, *, prelu):
    N, H, WCin = x_slab.shape
    WCout = bw.shape[2]
    out_shapes, out_specs = _conv_outputs(N, H, WCout)
    return pl.pallas_call(
        functools.partial(bn_conv_kernel, prelu=prelu),
        out_shape=out_shapes,
        grid=(N,),
        in_specs=[
            pl.BlockSpec((1, H, WCin), lambda n: (n, 0, 0)),
            pl.BlockSpec((1, WCin), lambda n: (0, 0)),
            pl.BlockSpec((1, WCin), lambda n: (0, 0)),
            pl.BlockSpec((3, WCin, WCout), lambda n: (0, 0, 0)),
        ],
        out_specs=out_specs,
        scratch_shapes=[pltpu.VMEM((H + 2, WCin), jnp.float32)],
        compiler_params=pltpu.CompilerParams(
            dimension_semantics=("parallel",),
            vmem_limit_bytes=_VMEM_LIMIT),
    )(x_slab, scale_row, shift_row, bw)


def bn_apply_final(y_slab, scale_row, shift_row, max_rows=256):
    """Final BatchNorm (no ReLU): row-tiled, lane-dense elementwise kernel."""
    R, C = y_slab.shape
    tile_r = max_rows if (R > max_rows and R % max_rows == 0) else R
    return pl.pallas_call(
        bn_lanedense_kernel,
        out_shape=jax.ShapeDtypeStruct((R, C), jnp.float32),
        grid=(R // tile_r,),
        in_specs=[
            pl.BlockSpec((tile_r, C), lambda r: (r, 0)),
            pl.BlockSpec((1, C), lambda r: (0, 0)),
            pl.BlockSpec((1, C), lambda r: (0, 0)),
        ],
        out_specs=pl.BlockSpec((tile_r, C), lambda r: (r, 0)),
        compiler_params=pltpu.CompilerParams(
            dimension_semantics=("parallel",),
            vmem_limit_bytes=_VMEM_LIMIT),
    )(y_slab, scale_row, shift_row)


# ----------------------------------------------------------------------------
# JAX glue: banded weights, interpolation matrices, BN folding, layout
# ----------------------------------------------------------------------------
def make_banded_weights(w_hwio, W):
    """HWIO (3,3,Cin,Cout) -> (3, W*Cin, W*Cout) bf16 banded matrices.

    BW[kh][(w+kw-1)*Cin + ci, w*Cout + co] = w[kh, kw, ci, co]; out-of-range
    kw taps are simply absent, which is exactly conv2d's zero padding in w.
    """
    mats = []
    for kh in range(3):
        bw = 0.0
        for kw in range(3):
            band = jnp.eye(W, k=1 - kw, dtype=jnp.float32)
            bw = bw + jnp.kron(band, w_hwio[kh, kw])
        mats.append(bw)
    return jnp.stack(mats, axis=0).astype(jnp.bfloat16)


def make_banded_weights_concat(w_hwio, W, C1):
    """Split-input banded weights for the fused concat: rows [0, W*C1) read the
    resized-x1 lanes, rows [W*C1, ...) read the x2 lanes."""
    bw1 = make_banded_weights(w_hwio[:, :, :C1, :], W)
    bw2 = make_banded_weights(w_hwio[:, :, C1:, :], W)
    return jnp.concatenate([bw1, bw2], axis=1)


def bn_rows_from_stats(stats, W, Cout, count, gamma, beta, eps=1e-5):
    """Fold training-mode BN (batch stats, biased variance) into lane-dense rows."""
    # TODO(synk): PyTorch running_mean/running_var momentum buffer updates are
    # not produced (forward value matches nn.BatchNorm2d in training mode).
    s = jnp.sum(stats[:, 0, :], axis=0).reshape(W, Cout).sum(axis=0)
    ss = jnp.sum(stats[:, 1, :], axis=0).reshape(W, Cout).sum(axis=0)
    mean = s / count
    var = jnp.maximum(ss / count - mean * mean, 0.0)
    scale = gamma * jax.lax.rsqrt(var + eps)
    shift = beta - mean * scale
    return (jnp.tile(scale, W).reshape(1, W * Cout),
            jnp.tile(shift, W).reshape(1, W * Cout))


def _interp_matrix(out_size, in_size):
    """Row-stochastic (out, in) matrix: bilinear, align_corners=True."""
    if in_size == 1:
        return jnp.ones((out_size, 1), jnp.float32)
    if out_size == 1:
        # TODO(synk): verify degenerate out_size==1 against PyTorch align_corners=True.
        return jnp.zeros((1, in_size), jnp.float32).at[0, 0].set(1.0)
    scale = (in_size - 1) / (out_size - 1)
    src = jnp.arange(out_size, dtype=jnp.float32) * scale
    i0 = jnp.clip(jnp.floor(src), 0, in_size - 1).astype(jnp.int32)
    i1 = jnp.minimum(i0 + 1, in_size - 1)
    frac = src - i0.astype(jnp.float32)
    oh0 = jax.nn.one_hot(i0, in_size, dtype=jnp.float32)
    oh1 = jax.nn.one_hot(i1, in_size, dtype=jnp.float32)
    return (1.0 - frac)[:, None] * oh0 + frac[:, None] * oh1


def _nchw_to_slab(x):
    """NCHW -> lane-dense (N, H, W*C): channel is fastest within each pixel."""
    N, C, H, W = x.shape
    return jnp.transpose(x, (0, 2, 3, 1)).reshape(N, H, W * C).astype(jnp.float32)


def up_block_forward(params, x1_nchw, x2_nchw, eps=1e-5):
    p = params
    N, C1, H1, W1 = x1_nchw.shape
    _, C2, H, W = x2_nchw.shape
    Cout = p["cb1_w1"].shape[-1]
    count = float(N * H * W)

    x1_slab = _nchw_to_slab(x1_nchw)                      # (N, H1, W1*C1)
    x2_slab = _nchw_to_slab(x2_nchw)                      # (N, H,  W*C2)

    # Interpolation matrices for the fused align_corners=True bilinear resize.
    mh = _interp_matrix(H, H1).astype(jnp.bfloat16)                       # (H, H1)
    mwc = jnp.kron(_interp_matrix(W, W1).T,
                   jnp.eye(C1, dtype=jnp.float32)).astype(jnp.bfloat16)   # (W1*C1, W*C1)

    # Banded conv weights (built once per call; the band structure folds the
    # w zero-padding so kernels only need a 1-row halo in VMEM).
    bw1 = make_banded_weights_concat(p["cb1_w1"], W, C1)
    bw2 = make_banded_weights(p["cb1_w2"], W)
    bw3 = make_banded_weights(p["cb2_w1"], W)
    bw4 = make_banded_weights(p["cb2_w2"], W)

    # cb1.conv1 on concat([resize(x1), x2]) -- resize + concat fused in-kernel.
    y1, st1 = concat_resize_conv(x1_slab, x2_slab, mh, mwc, bw1)
    sc1, sh1 = bn_rows_from_stats(st1, W, Cout, count, p["cb1_g1"], p["cb1_b1"], eps)

    # cb1.conv2 with cb1.bn1 + ReLU fused into its prologue.
    y2, st2 = bn_conv(y1, sc1, sh1, bw2, prelu=True)
    sc2, sh2 = bn_rows_from_stats(st2, W, Cout, count, p["cb1_g2"], p["cb1_b2"], eps)

    # cb2.conv1 with cb1.bn2 fused (no ReLU; dropout(p=0) == identity).
    y3, st3 = bn_conv(y2, sc2, sh2, bw3, prelu=False)
    sc3, sh3 = bn_rows_from_stats(st3, W, Cout, count, p["cb2_g1"], p["cb2_b1"], eps)

    # cb2.conv2 with cb2.bn1 + ReLU fused.
    y4, st4 = bn_conv(y3, sc3, sh3, bw4, prelu=True)
    sc4, sh4 = bn_rows_from_stats(st4, W, Cout, count, p["cb2_g2"], p["cb2_b2"], eps)

    # Final cb2.bn2 (no ReLU): row-tiled lane-dense elementwise pass.
    out = bn_apply_final(y4.reshape(N * H, W * Cout), sc4, sh4)
    out = out.reshape(N, H, W, Cout)
    return jnp.transpose(out, (0, 3, 1, 2))               # back to NCHW


# ----------------------------------------------------------------------------
# Deterministic parameter init (synthetic; shapes from UpBlock.__init__)
# ----------------------------------------------------------------------------
def init_params(key, in_channels, out_channels):
    ks = jax.random.split(key, 12)

    def conv_w(k, cin, cout):
        # PyTorch OIHW, converted to HWIO for the banded-weight builder.
        w = 0.1 * jax.random.normal(k, (cout, cin, 3, 3), jnp.float32)
        return jnp.transpose(w, (2, 3, 1, 0))

    def bn(kg, kb, c):
        g = 1.0 + 0.1 * jax.random.normal(kg, (c,), jnp.float32)
        b = 0.1 * jax.random.normal(kb, (c,), jnp.float32)
        return g, b

    p = {}
    # conv_block1: ConvBlock(in_channels, out_channels, dropout_rate=0)
    p["cb1_w1"] = conv_w(ks[0], in_channels, out_channels)
    p["cb1_g1"], p["cb1_b1"] = bn(ks[1], ks[2], out_channels)
    p["cb1_w2"] = conv_w(ks[3], out_channels, out_channels)
    p["cb1_g2"], p["cb1_b2"] = bn(ks[4], ks[5], out_channels)
    # conv_block2: ConvBlock(out_channels, out_channels, dropout_rate=0)
    p["cb2_w1"] = conv_w(ks[6], out_channels, out_channels)
    p["cb2_g1"], p["cb2_b1"] = bn(ks[7], ks[8], out_channels)
    p["cb2_w2"] = conv_w(ks[9], out_channels, out_channels)
    p["cb2_g2"], p["cb2_b2"] = bn(ks[10], ks[11], out_channels)
    return p


if __name__ == "__main__":
    key = jax.random.PRNGKey(0)
    k_x1, k_x2, k_p = jax.random.split(key, 3)

    # x1: deeper feature map (more channels, smaller spatial), x2: skip feature.
    N, C1, C2 = 2, 8, 4
    H1 = W1 = 8
    H2 = W2 = 16
    in_channels = C1 + C2          # 12
    out_channels = 8               # W*Cout = 128 -> lane-dense activations

    x1 = jax.random.normal(k_x1, (N, C1, H1, W1), jnp.float32)   # NCHW
    x2 = jax.random.normal(k_x2, (N, C2, H2, W2), jnp.float32)   # NCHW
    params = init_params(k_p, in_channels, out_channels)

    fwd = jax.jit(up_block_forward)
    out = fwd(params, x1, x2)
    jax.block_until_ready(out)

    assert out.shape == (N, out_channels, H2, W2), out.shape
    assert bool(jnp.all(jnp.isfinite(out)))
    print("KERNEL_OK")
</pallas_src>

<mosaic_0001>
module attributes {stable_mosaic.version = 11 : i64} {
  func.func @concat_resize_conv_kernel(%arg0: i32, %arg1: memref<1x8x64xf32, #tpu.memory_space<vmem>>, %arg2: memref<1x16x64xf32, #tpu.memory_space<vmem>>, %arg3: memref<16x8xbf16, #tpu.memory_space<vmem>>, %arg4: memref<64x128xbf16, #tpu.memory_space<vmem>>, %arg5: memref<3x192x128xbf16, #tpu.memory_space<vmem>>, %arg6: memref<1x16x128xbf16, #tpu.memory_space<vmem>>, %arg7: memref<1x2x128xf32, #tpu.memory_space<vmem>>, %arg8: memref<18x192xf32, #tpu.memory_space<vmem>>) attributes {dimension_semantics = [#tpu.dimension_semantics<parallel>], iteration_bounds = array<i64: 2>, scalar_prefetch = 0 : i64, scratch_operands = 1 : i64, tpu.core_type = #tpu.core_type<tc>, window_params = [{transform_indices = @transform_0, window_bounds = array<i64: 1, 8, 64>}, {transform_indices = @transform_1, window_bounds = array<i64: 1, 16, 64>}, {pipeline_mode = #tpu.pipeline_mode<synchronous>, transform_indices = @transform_2, window_bounds = array<i64: 16, 8>}, {pipeline_mode = #tpu.pipeline_mode<synchronous>, transform_indices = @transform_3, window_bounds = array<i64: 64, 128>}, {pipeline_mode = #tpu.pipeline_mode<synchronous>, transform_indices = @transform_4, window_bounds = array<i64: 3, 192, 128>}, {transform_indices = @transform_5, window_bounds = array<i64: 1, 16, 128>}, {transform_indices = @transform_6, window_bounds = array<i64: 1, 2, 128>}]} {
    %cst = arith.constant 0.000000e+00 : f32
    %0 = vector.broadcast %cst : f32 to vector<1x192xf32>
    %c0 = arith.constant 0 : index
    %c0_0 = arith.constant 0 : index
    %1 = vector.load %arg8[%c0, %c0_0] : memref<18x192xf32, #tpu.memory_space<vmem>>, vector<1x192xf32>
    tpu.vector_store %arg8[%c0, %c0_0], %0 {strides = array<i32>} : memref<18x192xf32, #tpu.memory_space<vmem>>, vector<1x192xf32>,
    %c17 = arith.constant 17 : index
    %c0_1 = arith.constant 0 : index
    %2 = vector.load %arg8[%c17, %c0_1] : memref<18x192xf32, #tpu.memory_space<vmem>>, vector<1x192xf32>
    tpu.vector_store %arg8[%c17, %c0_1], %0 {strides = array<i32>} : memref<18x192xf32, #tpu.memory_space<vmem>>, vector<1x192xf32>,
    %c0_2 = arith.constant 0 : index
    %c0_3 = arith.constant 0 : index
    %c0_4 = arith.constant 0 : index
    %3 = vector.load %arg1[%c0_2, %c0_3, %c0_4] : memref<1x8x64xf32, #tpu.memory_space<vmem>>, vector<1x8x64xf32>
    %4 = vector.shape_cast %3 : vector<1x8x64xf32> to vector<8x64xf32>
    %5 = arith.truncf %4 : vector<8x64xf32> to vector<8x64xbf16>
    %c0_5 = arith.constant 0 : index
    %c0_6 = arith.constant 0 : index
    %6 = vector.load %arg3[%c0_5, %c0_6] : memref<16x8xbf16, #tpu.memory_space<vmem>>, vector<16x8xbf16>
    %cst_7 = arith.constant dense<0.000000e+00> : vector<16x64xf32>
    %7 = tpu.matmul %6, %5, %cst_7 {dimension_numbers = #tpu.dot_dimension_numbers<[1], [0], [0], [1], [0, 0, 1, 1], [], []>} : vector<16x8xbf16>, vector<8x64xbf16>, vector<16x64xf32> -> vector<16x64xf32>
    %8 = arith.truncf %7 : vector<16x64xf32> to vector<16x64xbf16>
    %c0_8 = arith.constant 0 : index
    %c0_9 = arith.constant 0 : index
    %9 = vector.load %arg4[%c0_8, %c0_9] : memref<64x128xbf16, #tpu.memory_space<vmem>>, vector<64x128xbf16>
    %cst_10 = arith.constant dense<0.000000e+00> : vector<16x128xf32>
    %10 = tpu.matmul %8, %9, %cst_10 {dimension_numbers = #tpu.dot_dimension_numbers<[1], [0], [0], [1], [0, 0, 1, 1], [], []>} : vector<16x64xbf16>, vector<64x128xbf16>, vector<16x128xf32> -> vector<16x128xf32>
    %c1 = arith.constant 1 : index
    %c0_11 = arith.constant 0 : index
    %11 = vector.load %arg8[%c1, %c0_11] : memref<18x192xf32, #tpu.memory_space<vmem>>, vector<16x128xf32>
    tpu.vector_store %arg8[%c1, %c0_11], %10 {strides = array<i32>} : memref<18x192xf32, #tpu.memory_space<vmem>>, vector<16x128xf32>,
    %c0_12 = arith.constant 0 : index
    %c0_13 = arith.constant 0 : index
    %c0_14 = arith.constant 0 : index
    %12 = vector.load %arg2[%c0_12, %c0_13, %c0_14] : memref<1x16x64xf32, #tpu.memory_space<vmem>>, vector<1x16x64xf32>
    %13 = vector.shape_cast %12 : vector<1x16x64xf32> to vector<16x64xf32>
    %c1_15 = arith.constant 1 : index
    %c128 = arith.constant 128 : index
    %14 = vector.load %arg8[%c1_15, %c128] : memref<18x192xf32, #tpu.memory_space<vmem>>, vector<16x64xf32>
    tpu.vector_store %arg8[%c1_15, %c128], %13 {strides = array<i32>} : memref<18x192xf32, #tpu.memory_space<vmem>>, vector<16x64xf32>,
    %c0_16 = arith.constant 0 : index
    %c0_17 = arith.constant 0 : index
    %15 = vector.load %arg8[%c0_16, %c0_17] : memref<18x192xf32, #tpu.memory_space<vmem>>, vector<16x192xf32>
    %16 = arith.truncf %15 : vector<16x192xf32> to vector<16x192xbf16>
    %c0_18 = arith.constant 0 : index
    %c0_19 = arith.constant 0 : index
    %c0_20 = arith.constant 0 : index
    %17 = vector.load %arg5[%c0_18, %c0_19, %c0_20] : memref<3x192x128xbf16, #tpu.memory_space<vmem>>, vector<1x192x128xbf16>
    %18 = vector.shape_cast %17 : vector<1x192x128xbf16> to vector<192x128xbf16>
    %cst_21 = arith.constant dense<0.000000e+00> : vector<16x128xf32>
    %19 = tpu.matmul %16, %18, %cst_21 {dimension_numbers = #tpu.dot_dimension_numbers<[1], [0], [0], [1], [0, 0, 1, 1], [], []>} : vector<16x192xbf16>, vector<192x128xbf16>, vector<16x128xf32> -> vector<16x128xf32>
    %c1_22 = arith.constant 1 : index
    %c0_23 = arith.constant 0 : index
    %20 = vector.load %arg8[%c1_22, %c0_23] : memref<18x192xf32, #tpu.memory_space<vmem>>, vector<16x192xf32>
    %21 = arith.truncf %20 : vector<16x192xf32> to vector<16x192xbf16>
    %c1_24 = arith.constant 1 : index
    %c0_25 = arith.constant 0 : index
    %c0_26 = arith.constant 0 : index
    %22 = vector.load %arg5[%c1_24, %c0_25, %c0_26] : memref<3x192x128xbf16, #tpu.memory_space<vmem>>, vector<1x192x128xbf16>
    %23 = vector.shape_cast %22 : vector<1x192x128xbf16> to vector<192x128xbf16>
    %cst_27 = arith.constant dense<0.000000e+00> : vector<16x128xf32>
    %24 = tpu.matmul %21, %23, %cst_27 {dimension_numbers = #tpu.dot_dimension_numbers<[1], [0], [0], [1], [0, 0, 1, 1], [], []>} : vector<16x192xbf16>, vector<192x128xbf16>, vector<16x128xf32> -> vector<16x128xf32>
    %25 = arith.addf %19, %24 : vector<16x128xf32>
    %c2 = arith.constant 2 : index
    %c0_28 = arith.constant 0 : index
    %26 = vector.load %arg8[%c2, %c0_28] : memref<18x192xf32, #tpu.memory_space<vmem>>, vector<16x192xf32>
    %27 = arith.truncf %26 : vector<16x192xf32> to vector<16x192xbf16>
    %c2_29 = arith.constant 2 : index
    %c0_30 = arith.constant 0 : index
    %c0_31 = arith.constant 0 : index
    %28 = vector.load %arg5[%c2_29, %c0_30, %c0_31] : memref<3x192x128xbf16, #tpu.memory_space<vmem>>, vector<1x192x128xbf16>
    %29 = vector.shape_cast %28 : vector<1x192x128xbf16> to vector<192x128xbf16>
    %cst_32 = arith.constant dense<0.000000e+00> : vector<16x128xf32>
    %30 = tpu.matmul %27, %29, %cst_32 {dimension_numbers = #tpu.dot_dimension_numbers<[1], [0], [0], [1], [0, 0, 1, 1], [], []>} : vector<16x192xbf16>, vector<192x128xbf16>, vector<16x128xf32> -> vector<16x128xf32>
    %31 = arith.addf %25, %30 : vector<16x128xf32>
    %32 = arith.truncf %31 : vector<16x128xf32> to vector<16x128xbf16>
    %c0_33 = arith.constant 0 : index
    %c0_34 = arith.constant 0 : index
    %c0_35 = arith.constant 0 : index
    %33 = vector.load %arg6[%c0_33, %c0_34, %c0_35] : memref<1x16x128xbf16, #tpu.memory_space<vmem>>, vector<1x16x128xbf16>
    %34 = vector.shape_cast %33 : vector<1x16x128xbf16> to vector<16x128xbf16>
    %35 = vector.shape_cast %32 : vector<16x128xbf16> to vector<1x16x128xbf16>
    tpu.vector_store %arg6[%c0_33, %c0_34, %c0_35], %35 {strides = array<i32>} : memref<1x16x128xbf16, #tpu.memory_space<vmem>>, vector<1x16x128xbf16>,
    %cst_36 = arith.constant dense<0.000000e+00> : vector<128xf32>
    %36 = vector.multi_reduction <add>, %31, %cst_36 [0] : vector<16x128xf32> to vector<128xf32>
    %37 = vector.shape_cast %36 : vector<128xf32> to vector<1x128xf32>
    %38 = arith.mulf %31, %31 : vector<16x128xf32>
    %cst_37 = arith.constant dense<0.000000e+00> : vector<128xf32>
    %39 = vector.multi_reduction <add>, %38, %cst_37 [0] : vector<16x128xf32> to vector<128xf32>
    %40 = vector.shape_cast %39 : vector<128xf32> to vector<1x128xf32>
    %41 = tpu.concatenate %37, %40 in 0 : vector<1x128xf32>, vector<1x128xf32> -> vector<2x128xf32>
    %c0_38 = arith.constant 0 : index
    %c0_39 = arith.constant 0 : index
    %c0_40 = arith.constant 0 : index
    %42 = vector.load %arg7[%c0_38, %c0_39, %c0_40] : memref<1x2x128xf32, #tpu.memory_space<vmem>>, vector<1x2x128xf32>
    %43 = vector.shape_cast %42 : vector<1x2x128xf32> to vector<2x128xf32>
    %44 = vector.shape_cast %41 : vector<2x128xf32> to vector<1x2x128xf32>
    tpu.vector_store %arg7[%c0_38, %c0_39, %c0_40], %44 {strides = array<i32>} : memref<1x2x128xf32, #tpu.memory_space<vmem>>, vector<1x2x128xf32>,
    return
  }
  func.func @transform_0(%arg0: i32) -> (i32, i32, i32) {
    %c0_i32 = arith.constant 0 : i32
    %c0_i32_0 = arith.constant 0 : i32
    %c0_i32_1 = arith.constant 0 : i32
    return %arg0, %c0_i32, %c0_i32_0 : i32, i32, i32
  }
  func.func @transform_1(%arg0: i32) -> (i32, i32, i32) {
    %c0_i32 = arith.constant 0 : i32
    %c0_i32_0 = arith.constant 0 : i32
    %c0_i32_1 = arith.constant 0 : i32
    return %arg0, %c0_i32, %c0_i32_0 : i32, i32, i32
  }
  func.func @transform_2(%arg0: i32) -> (i32, i32) {
    %c0_i32 = arith.constant 0 : i32
    %c0_i32_0 = arith.constant 0 : i32
    %c0_i32_1 = arith.constant 0 : i32
    return %c0_i32, %c0_i32_0 : i32, i32
  }
  func.func @transform_3(%arg0: i32) -> (i32, i32) {
    %c0_i32 = arith.constant 0 : i32
    %c0_i32_0 = arith.constant 0 : i32
    %c0_i32_1 = arith.constant 0 : i32
    return %c0_i32, %c0_i32_0 : i32, i32
  }
  func.func @transform_4(%arg0: i32) -> (i32, i32, i32) {
    %c0_i32 = arith.constant 0 : i32
    %c0_i32_0 = arith.constant 0 : i32
    %c0_i32_1 = arith.constant 0 : i32
    %c0_i32_2 = arith.constant 0 : i32
    return %c0_i32, %c0_i32_0, %c0_i32_1 : i32, i32, i32
  }
  func.func @transform_5(%arg0: i32) -> (i32, i32, i32) {
    %c0_i32 = arith.constant 0 : i32
    %c0_i32_0 = arith.constant 0 : i32
    %c0_i32_1 = arith.constant 0 : i32
    return %arg0, %c0_i32, %c0_i32_0 : i32, i32, i32
  }
  func.func @transform_6(%arg0: i32) -> (i32, i32, i32) {
    %c0_i32 = arith.constant 0 : i32
    %c0_i32_0 = arith.constant 0 : i32
    %c0_i32_1 = arith.constant 0 : i32
    return %arg0, %c0_i32, %c0_i32_0 : i32, i32, i32
  }
}

module attributes {stable_mosaic.version = 11 : i64} {
  func.func @bn_conv_kernel(%arg0: i32, %arg1: memref<1x16x128xbf16, #tpu.memory_space<vmem>>, %arg2: memref<1x128xf32, #tpu.memory_space<vmem>>, %arg3: memref<1x128xf32, #tpu.memory_space<vmem>>, %arg4: memref<3x128x128xbf16, #tpu.memory_space<vmem>>, %arg5: memref<1x16x128xbf16, #tpu.memory_space<vmem>>, %arg6: memref<1x2x128xf32, #tpu.memory_space<vmem>>, %arg7: memref<18x128xf32, #tpu.memory_space<vmem>>) attributes {dimension_semantics = [#tpu.dimension_semantics<parallel>], iteration_bounds = array<i64: 2>, scalar_prefetch = 0 : i64, scratch_operands = 1 : i64, tpu.core_type = #tpu.core_type<tc>, window_params = [{transform_indices = @transform_0, window_bounds = array<i64: 1, 16, 128>}, {pipeline_mode = #tpu.pipeline_mode<synchronous>, transform_indices = @transform_1, window_bounds = array<i64: 1, 128>}, {pipeline_mode = #tpu.pipeline_mode<synchronous>, transform_indices = @transform_2, window_bounds = array<i64: 1, 128>}, {pipeline_mode = #tpu.pipeline_mode<synchronous>, transform_indices = @transform_3, window_bounds = array<i64: 3, 128, 128>}, {transform_indices = @transform_4, window_bounds = array<i64: 1, 16, 128>}, {transform_indices = @transform_5, window_bounds = array<i64: 1, 2, 128>}]} {
    %cst = arith.constant 0.000000e+00 : f32
    %0 = vector.broadcast %cst : f32 to vector<1x128xf32>
    %c0 = arith.constant 0 : index
    %c0_0 = arith.constant 0 : index
    %1 = vector.load %arg7[%c0, %c0_0] : memref<18x128xf32, #tpu.memory_space<vmem>>, vector<1x128xf32>
    tpu.vector_store %arg7[%c0, %c0_0], %0 {strides = array<i32>} : memref<18x128xf32, #tpu.memory_space<vmem>>, vector<1x128xf32>,
    %c17 = arith.constant 17 : index
    %c0_1 = arith.constant 0 : index
    %2 = vector.load %arg7[%c17, %c0_1] : memref<18x128xf32, #tpu.memory_space<vmem>>, vector<1x128xf32>
    tpu.vector_store %arg7[%c17, %c0_1], %0 {strides = array<i32>} : memref<18x128xf32, #tpu.memory_space<vmem>>, vector<1x128xf32>,
    %c0_2 = arith.constant 0 : index
    %c0_3 = arith.constant 0 : index
    %c0_4 = arith.constant 0 : index
    %3 = vector.load %arg1[%c0_2, %c0_3, %c0_4] : memref<1x16x128xbf16, #tpu.memory_space<vmem>>, vector<1x16x128xbf16>
    %4 = vector.shape_cast %3 : vector<1x16x128xbf16> to vector<16x128xbf16>
    %5 = arith.extf %4 : vector<16x128xbf16> to vector<16x128xf32>
    %c0_5 = arith.constant 0 : index
    %c0_6 = arith.constant 0 : index
    %6 = vector.load %arg2[%c0_5, %c0_6] : memref<1x128xf32, #tpu.memory_space<vmem>>, vector<1x128xf32>
    %7 = vector.broadcast %6 : vector<1x128xf32> to vector<16x128xf32>
    %8 = arith.mulf %5, %7 : vector<16x128xf32>
    %c0_7 = arith.constant 0 : index
    %c0_8 = arith.constant 0 : index
    %9 = vector.load %arg3[%c0_7, %c0_8] : memref<1x128xf32, #tpu.memory_space<vmem>>, vector<1x128xf32>
    %10 = vector.broadcast %9 : vector<1x128xf32> to vector<16x128xf32>
    %11 = arith.addf %8, %10 : vector<16x128xf32>
    %c1 = arith.constant 1 : index
    %c0_9 = arith.constant 0 : index
    %12 = vector.load %arg7[%c1, %c0_9] : memref<18x128xf32, #tpu.memory_space<vmem>>, vector<16x128xf32>
    tpu.vector_store %arg7[%c1, %c0_9], %11 {strides = array<i32>} : memref<18x128xf32, #tpu.memory_space<vmem>>, vector<16x128xf32>,
    %c0_10 = arith.constant 0 : index
    %c0_11 = arith.constant 0 : index
    %13 = vector.load %arg7[%c0_10, %c0_11] : memref<18x128xf32, #tpu.memory_space<vmem>>, vector<16x128xf32>
    %14 = arith.truncf %13 : vector<16x128xf32> to vector<16x128xbf16>
    %c0_12 = arith.constant 0 : index
    %c0_13 = arith.constant 0 : index
    %c0_14 = arith.constant 0 : index
    %15 = vector.load %arg4[%c0_12, %c0_13, %c0_14] : memref<3x128x128xbf16, #tpu.memory_space<vmem>>, vector<1x128x128xbf16>
    %16 = vector.shape_cast %15 : vector<1x128x128xbf16> to vector<128x128xbf16>
    %cst_15 = arith.constant dense<0.000000e+00> : vector<16x128xf32>
    %17 = tpu.matmul %14, %16, %cst_15 {dimension_numbers = #tpu.dot_dimension_numbers<[1], [0], [0], [1], [0, 0, 1, 1], [], []>} : vector<16x128xbf16>, vector<128x128xbf16>, vector<16x128xf32> -> vector<16x128xf32>
    %c1_16 = arith.constant 1 : index
    %c0_17 = arith.constant 0 : index
    %18 = vector.load %arg7[%c1_16, %c0_17] : memref<18x128xf32, #tpu.memory_space<vmem>>, vector<16x128xf32>
    %19 = arith.truncf %18 : vector<16x128xf32> to vector<16x128xbf16>
    %c1_18 = arith.constant 1 : index
    %c0_19 = arith.constant 0 : index
    %c0_20 = arith.constant 0 : index
    %20 = vector.load %arg4[%c1_18, %c0_19, %c0_20] : memref<3x128x128xbf16, #tpu.memory_space<vmem>>, vector<1x128x128xbf16>
    %21 = vector.shape_cast %20 : vector<1x128x128xbf16> to vector<128x128xbf16>
    %cst_21 = arith.constant dense<0.000000e+00> : vector<16x128xf32>
    %22 = tpu.matmul %19, %21, %cst_21 {dimension_numbers = #tpu.dot_dimension_numbers<[1], [0], [0], [1], [0, 0, 1, 1], [], []>} : vector<16x128xbf16>, vector<128x128xbf16>, vector<16x128xf32> -> vector<16x128xf32>
    %23 = arith.addf %17, %22 : vector<16x128xf32>
    %c2 = arith.constant 2 : index
    %c0_22 = arith.constant 0 : index
    %24 = vector.load %arg7[%c2, %c0_22] : memref<18x128xf32, #tpu.memory_space<vmem>>, vector<16x128xf32>
    %25 = arith.truncf %24 : vector<16x128xf32> to vector<16x128xbf16>
    %c2_23 = arith.constant 2 : index
    %c0_24 = arith.constant 0 : index
    %c0_25 = arith.constant 0 : index
    %26 = vector.load %arg4[%c2_23, %c0_24, %c0_25] : memref<3x128x128xbf16, #tpu.memory_space<vmem>>, vector<1x128x128xbf16>
    %27 = vector.shape_cast %26 : vector<1x128x128xbf16> to vector<128x128xbf16>
    %cst_26 = arith.constant dense<0.000000e+00> : vector<16x128xf32>
    %28 = tpu.matmul %25, %27, %cst_26 {dimension_numbers = #tpu.dot_dimension_numbers<[1], [0], [0], [1], [0, 0, 1, 1], [], []>} : vector<16x128xbf16>, vector<128x128xbf16>, vector<16x128xf32> -> vector<16x128xf32>
    %29 = arith.addf %23, %28 : vector<16x128xf32>
    %30 = arith.truncf %29 : vector<16x128xf32> to vector<16x128xbf16>
    %c0_27 = arith.constant 0 : index
    %c0_28 = arith.constant 0 : index
    %c0_29 = arith.constant 0 : index
    %31 = vector.load %arg5[%c0_27, %c0_28, %c0_29] : memref<1x16x128xbf16, #tpu.memory_space<vmem>>, vector<1x16x128xbf16>
    %32 = vector.shape_cast %31 : vector<1x16x128xbf16> to vector<16x128xbf16>
    %33 = vector.shape_cast %30 : vector<16x128xbf16> to vector<1x16x128xbf16>
    tpu.vector_store %arg5[%c0_27, %c0_28, %c0_29], %33 {strides = array<i32>} : memref<1x16x128xbf16, #tpu.memory_space<vmem>>, vector<1x16x128xbf16>,
    %cst_30 = arith.constant dense<0.000000e+00> : vector<128xf32>
    %34 = vector.multi_reduction <add>, %29, %cst_30 [0] : vector<16x128xf32> to vector<128xf32>
    %35 = vector.shape_cast %34 : vector<128xf32> to vector<1x128xf32>
    %36 = arith.mulf %29, %29 : vector<16x128xf32>
    %cst_31 = arith.constant dense<0.000000e+00> : vector<128xf32>
    %37 = vector.multi_reduction <add>, %36, %cst_31 [0] : vector<16x128xf32> to vector<128xf32>
    %38 = vector.shape_cast %37 : vector<128xf32> to vector<1x128xf32>
    %39 = tpu.concatenate %35, %38 in 0 : vector<1x128xf32>, vector<1x128xf32> -> vector<2x128xf32>
    %c0_32 = arith.constant 0 : index
    %c0_33 = arith.constant 0 : index
    %c0_34 = arith.constant 0 : index
    %40 = vector.load %arg6[%c0_32, %c0_33, %c0_34] : memref<1x2x128xf32, #tpu.memory_space<vmem>>, vector<1x2x128xf32>
    %41 = vector.shape_cast %40 : vector<1x2x128xf32> to vector<2x128xf32>
    %42 = vector.shape_cast %39 : vector<2x128xf32> to vector<1x2x128xf32>
    tpu.vector_store %arg6[%c0_32, %c0_33, %c0_34], %42 {strides = array<i32>} : memref<1x2x128xf32, #tpu.memory_space<vmem>>, vector<1x2x128xf32>,
    return
  }
  func.func @transform_0(%arg0: i32) -> (i32, i32, i32) {
    %c0_i32 = arith.constant 0 : i32
    %c0_i32_0 = arith.constant 0 : i32
    %c0_i32_1 = arith.constant 0 : i32
    return %arg0, %c0_i32, %c0_i32_0 : i32, i32, i32
  }
  func.func @transform_1(%arg0: i32) -> (i32, i32) {
    %c0_i32 = arith.constant 0 : i32
    %c0_i32_0 = arith.constant 0 : i32
    %c0_i32_1 = arith.constant 0 : i32
    return %c0_i32, %c0_i32_0 : i32, i32
  }
  func.func @transform_2(%arg0: i32) -> (i32, i32) {
    %c0_i32 = arith.constant 0 : i32
    %c0_i32_0 = arith.constant 0 : i32
    %c0_i32_1 = arith.constant 0 : i32
    return %c0_i32, %c0_i32_0 : i32, i32
  }
  func.func @transform_3(%arg0: i32) -> (i32, i32, i32) {
    %c0_i32 = arith.constant 0 : i32
    %c0_i32_0 = arith.constant 0 : i32
    %c0_i32_1 = arith.constant 0 : i32
    %c0_i32_2 = arith.constant 0 : i32
    return %c0_i32, %c0_i32_0, %c0_i32_1 : i32, i32, i32
  }
  func.func @transform_4(%arg0: i32) -> (i32, i32, i32) {
    %c0_i32 = arith.constant 0 : i32
    %c0_i32_0 = arith.constant 0 : i32
    %c0_i32_1 = arith.constant 0 : i32
    return %arg0, %c0_i32, %c0_i32_0 : i32, i32, i32
  }
  func.func @transform_5(%arg0: i32) -> (i32, i32, i32) {
    %c0_i32 = arith.constant 0 : i32
    %c0_i32_0 = arith.constant 0 : i32
    %c0_i32_1 = arith.constant 0 : i32
    return %arg0, %c0_i32, %c0_i32_0 : i32, i32, i32
  }
}

module attributes {stable_mosaic.version = 11 : i64} {
  func.func @bn_conv_kernel(%arg0: i32, %arg1: memref<1x16x128xbf16, #tpu.memory_space<vmem>>, %arg2: memref<1x128xf32, #tpu.memory_space<vmem>>, %arg3: memref<1x128xf32, #tpu.memory_space<vmem>>, %arg4: memref<3x128x128xbf16, #tpu.memory_space<vmem>>, %arg5: memref<1x16x128xbf16, #tpu.memory_space<vmem>>, %arg6: memref<1x2x128xf32, #tpu.memory_space<vmem>>, %arg7: memref<18x128xf32, #tpu.memory_space<vmem>>) attributes {dimension_semantics = [#tpu.dimension_semantics<parallel>], iteration_bounds = array<i64: 2>, scalar_prefetch = 0 : i64, scratch_operands = 1 : i64, tpu.core_type = #tpu.core_type<tc>, window_params = [{transform_indices = @transform_0, window_bounds = array<i64: 1, 16, 128>}, {pipeline_mode = #tpu.pipeline_mode<synchronous>, transform_indices = @transform_1, window_bounds = array<i64: 1, 128>}, {pipeline_mode = #tpu.pipeline_mode<synchronous>, transform_indices = @transform_2, window_bounds = array<i64: 1, 128>}, {pipeline_mode = #tpu.pipeline_mode<synchronous>, transform_indices = @transform_3, window_bounds = array<i64: 3, 128, 128>}, {transform_indices = @transform_4, window_bounds = array<i64: 1, 16, 128>}, {transform_indices = @transform_5, window_bounds = array<i64: 1, 2, 128>}]} {
    %cst = arith.constant 0.000000e+00 : f32
    %0 = vector.broadcast %cst : f32 to vector<1x128xf32>
    %c0 = arith.constant 0 : index
    %c0_0 = arith.constant 0 : index
    %1 = vector.load %arg7[%c0, %c0_0] : memref<18x128xf32, #tpu.memory_space<vmem>>, vector<1x128xf32>
    tpu.vector_store %arg7[%c0, %c0_0], %0 {strides = array<i32>} : memref<18x128xf32, #tpu.memory_space<vmem>>, vector<1x128xf32>,
    %c17 = arith.constant 17 : index
    %c0_1 = arith.constant 0 : index
    %2 = vector.load %arg7[%c17, %c0_1] : memref<18x128xf32, #tpu.memory_space<vmem>>, vector<1x128xf32>
    tpu.vector_store %arg7[%c17, %c0_1], %0 {strides = array<i32>} : memref<18x128xf32, #tpu.memory_space<vmem>>, vector<1x128xf32>,
    %c0_2 = arith.constant 0 : index
    %c0_3 = arith.constant 0 : index
    %c0_4 = arith.constant 0 : index
    %3 = vector.load %arg1[%c0_2, %c0_3, %c0_4] : memref<1x16x128xbf16, #tpu.memory_space<vmem>>, vector<1x16x128xbf16>
    %4 = vector.shape_cast %3 : vector<1x16x128xbf16> to vector<16x128xbf16>
    %5 = arith.extf %4 : vector<16x128xbf16> to vector<16x128xf32>
    %c0_5 = arith.constant 0 : index
    %c0_6 = arith.constant 0 : index
    %6 = vector.load %arg2[%c0_5, %c0_6] : memref<1x128xf32, #tpu.memory_space<vmem>>, vector<1x128xf32>
    %7 = vector.broadcast %6 : vector<1x128xf32> to vector<16x128xf32>
    %8 = arith.mulf %5, %7 : vector<16x128xf32>
    %c0_7 = arith.constant 0 : index
    %c0_8 = arith.constant 0 : index
    %9 = vector.load %arg3[%c0_7, %c0_8] : memref<1x128xf32, #tpu.memory_space<vmem>>, vector<1x128xf32>
    %10 = vector.broadcast %9 : vector<1x128xf32> to vector<16x128xf32>
    %11 = arith.addf %8, %10 : vector<16x128xf32>
    %cst_9 = arith.constant 0.000000e+00 : f32
    %12 = vector.broadcast %cst_9 : f32 to vector<16x128xf32>
    %13 = arith.maximumf %11, %12 : vector<16x128xf32>
    %c1 = arith.constant 1 : index
    %c0_10 = arith.constant 0 : index
    %14 = vector.load %arg7[%c1, %c0_10] : memref<18x128xf32, #tpu.memory_space<vmem>>, vector<16x128xf32>
    tpu.vector_store %arg7[%c1, %c0_10], %13 {strides = array<i32>} : memref<18x128xf32, #tpu.memory_space<vmem>>, vector<16x128xf32>,
    %c0_11 = arith.constant 0 : index
    %c0_12 = arith.constant 0 : index
    %15 = vector.load %arg7[%c0_11, %c0_12] : memref<18x128xf32, #tpu.memory_space<vmem>>, vector<16x128xf32>
    %16 = arith.truncf %15 : vector<16x128xf32> to vector<16x128xbf16>
    %c0_13 = arith.constant 0 : index
    %c0_14 = arith.constant 0 : index
    %c0_15 = arith.constant 0 : index
    %17 = vector.load %arg4[%c0_13, %c0_14, %c0_15] : memref<3x128x128xbf16, #tpu.memory_space<vmem>>, vector<1x128x128xbf16>
    %18 = vector.shape_cast %17 : vector<1x128x128xbf16> to vector<128x128xbf16>
    %cst_16 = arith.constant dense<0.000000e+00> : vector<16x128xf32>
    %19 = tpu.matmul %16, %18, %cst_16 {dimension_numbers = #tpu.dot_dimension_numbers<[1], [0], [0], [1], [0, 0, 1, 1], [], []>} : vector<16x128xbf16>, vector<128x128xbf16>, vector<16x128xf32> -> vector<16x128xf32>
    %c1_17 = arith.constant 1 : index
    %c0_18 = arith.constant 0 : index
    %20 = vector.load %arg7[%c1_17, %c0_18] : memref<18x128xf32, #tpu.memory_space<vmem>>, vector<16x128xf32>
    %21 = arith.truncf %20 : vector<16x128xf32> to vector<16x128xbf16>
    %c1_19 = arith.constant 1 : index
    %c0_20 = arith.constant 0 : index
    %c0_21 = arith.constant 0 : index
    %22 = vector.load %arg4[%c1_19, %c0_20, %c0_21] : memref<3x128x128xbf16, #tpu.memory_space<vmem>>, vector<1x128x128xbf16>
    %23 = vector.shape_cast %22 : vector<1x128x128xbf16> to vector<128x128xbf16>
    %cst_22 = arith.constant dense<0.000000e+00> : vector<16x128xf32>
    %24 = tpu.matmul %21, %23, %cst_22 {dimension_numbers = #tpu.dot_dimension_numbers<[1], [0], [0], [1], [0, 0, 1, 1], [], []>} : vector<16x128xbf16>, vector<128x128xbf16>, vector<16x128xf32> -> vector<16x128xf32>
    %25 = arith.addf %19, %24 : vector<16x128xf32>
    %c2 = arith.constant 2 : index
    %c0_23 = arith.constant 0 : index
    %26 = vector.load %arg7[%c2, %c0_23] : memref<18x128xf32, #tpu.memory_space<vmem>>, vector<16x128xf32>
    %27 = arith.truncf %26 : vector<16x128xf32> to vector<16x128xbf16>
    %c2_24 = arith.constant 2 : index
    %c0_25 = arith.constant 0 : index
    %c0_26 = arith.constant 0 : index
    %28 = vector.load %arg4[%c2_24, %c0_25, %c0_26] : memref<3x128x128xbf16, #tpu.memory_space<vmem>>, vector<1x128x128xbf16>
    %29 = vector.shape_cast %28 : vector<1x128x128xbf16> to vector<128x128xbf16>
    %cst_27 = arith.constant dense<0.000000e+00> : vector<16x128xf32>
    %30 = tpu.matmul %27, %29, %cst_27 {dimension_numbers = #tpu.dot_dimension_numbers<[1], [0], [0], [1], [0, 0, 1, 1], [], []>} : vector<16x128xbf16>, vector<128x128xbf16>, vector<16x128xf32> -> vector<16x128xf32>
    %31 = arith.addf %25, %30 : vector<16x128xf32>
    %32 = arith.truncf %31 : vector<16x128xf32> to vector<16x128xbf16>
    %c0_28 = arith.constant 0 : index
    %c0_29 = arith.constant 0 : index
    %c0_30 = arith.constant 0 : index
    %33 = vector.load %arg5[%c0_28, %c0_29, %c0_30] : memref<1x16x128xbf16, #tpu.memory_space<vmem>>, vector<1x16x128xbf16>
    %34 = vector.shape_cast %33 : vector<1x16x128xbf16> to vector<16x128xbf16>
    %35 = vector.shape_cast %32 : vector<16x128xbf16> to vector<1x16x128xbf16>
    tpu.vector_store %arg5[%c0_28, %c0_29, %c0_30], %35 {strides = array<i32>} : memref<1x16x128xbf16, #tpu.memory_space<vmem>>, vector<1x16x128xbf16>,
    %cst_31 = arith.constant dense<0.000000e+00> : vector<128xf32>
    %36 = vector.multi_reduction <add>, %31, %cst_31 [0] : vector<16x128xf32> to vector<128xf32>
    %37 = vector.shape_cast %36 : vector<128xf32> to vector<1x128xf32>
    %38 = arith.mulf %31, %31 : vector<16x128xf32>
    %cst_32 = arith.constant dense<0.000000e+00> : vector<128xf32>
    %39 = vector.multi_reduction <add>, %38, %cst_32 [0] : vector<16x128xf32> to vector<128xf32>
    %40 = vector.shape_cast %39 : vector<128xf32> to vector<1x128xf32>
    %41 = tpu.concatenate %37, %40 in 0 : vector<1x128xf32>, vector<1x128xf32> -> vector<2x128xf32>
    %c0_33 = arith.constant 0 : index
    %c0_34 = arith.constant 0 : index
    %c0_35 = arith.constant 0 : index
    %42 = vector.load %arg6[%c0_33, %c0_34, %c0_35] : memref<1x2x128xf32, #tpu.memory_space<vmem>>, vector<1x2x128xf32>
    %43 = vector.shape_cast %42 : vector<1x2x128xf32> to vector<2x128xf32>
    %44 = vector.shape_cast %41 : vector<2x128xf32> to vector<1x2x128xf32>
    tpu.vector_store %arg6[%c0_33, %c0_34, %c0_35], %44 {strides = array<i32>} : memref<1x2x128xf32, #tpu.memory_space<vmem>>, vector<1x2x128xf32>,
    return
  }
  func.func @transform_0(%arg0: i32) -> (i32, i32, i32) {
    %c0_i32 = arith.constant 0 : i32
    %c0_i32_0 = arith.constant 0 : i32
    %c0_i32_1 = arith.constant 0 : i32
    return %arg0, %c0_i32, %c0_i32_0 : i32, i32, i32
  }
  func.func @transform_1(%arg0: i32) -> (i32, i32) {
    %c0_i32 = arith.constant 0 : i32
    %c0_i32_0 = arith.constant 0 : i32
    %c0_i32_1 = arith.constant 0 : i32
    return %c0_i32, %c0_i32_0 : i32, i32
  }
  func.func @transform_2(%arg0: i32) -> (i32, i32) {
    %c0_i32 = arith.constant 0 : i32
    %c0_i32_0 = arith.constant 0 : i32
    %c0_i32_1 = arith.constant 0 : i32
    return %c0_i32, %c0_i32_0 : i32, i32
  }
  func.func @transform_3(%arg0: i32) -> (i32, i32, i32) {
    %c0_i32 = arith.constant 0 : i32
    %c0_i32_0 = arith.constant 0 : i32
    %c0_i32_1 = arith.constant 0 : i32
    %c0_i32_2 = arith.constant 0 : i32
    return %c0_i32, %c0_i32_0, %c0_i32_1 : i32, i32, i32
  }
  func.func @transform_4(%arg0: i32) -> (i32, i32, i32) {
    %c0_i32 = arith.constant 0 : i32
    %c0_i32_0 = arith.constant 0 : i32
    %c0_i32_1 = arith.constant 0 : i32
    return %arg0, %c0_i32, %c0_i32_0 : i32, i32, i32
  }
  func.func @transform_5(%arg0: i32) -> (i32, i32, i32) {
    %c0_i32 = arith.constant 0 : i32
    %c0_i32_0 = arith.constant 0 : i32
    %c0_i32_1 = arith.constant 0 : i32
    return %arg0, %c0_i32, %c0_i32_0 : i32, i32, i32
  }
}

module attributes {stable_mosaic.version = 11 : i64} {
  func.func @bn_lanedense_kernel(%arg0: i32, %arg1: memref<32x128xbf16, #tpu.memory_space<vmem>>, %arg2: memref<1x128xf32, #tpu.memory_space<vmem>>, %arg3: memref<1x128xf32, #tpu.memory_space<vmem>>, %arg4: memref<32x128xf32, #tpu.memory_space<vmem>>) attributes {dimension_semantics = [#tpu.dimension_semantics<parallel>], iteration_bounds = array<i64: 1>, scalar_prefetch = 0 : i64, scratch_operands = 0 : i64, tpu.core_type = #tpu.core_type<tc>, window_params = [{transform_indices = @transform_0, window_bounds = array<i64: 32, 128>}, {pipeline_mode = #tpu.pipeline_mode<synchronous>, transform_indices = @transform_1, window_bounds = array<i64: 1, 128>}, {pipeline_mode = #tpu.pipeline_mode<synchronous>, transform_indices = @transform_2, window_bounds = array<i64: 1, 128>}, {transform_indices = @transform_3, window_bounds = array<i64: 32, 128>}]} {
    %c0 = arith.constant 0 : index
    %c0_0 = arith.constant 0 : index
    %0 = vector.load %arg1[%c0, %c0_0] : memref<32x128xbf16, #tpu.memory_space<vmem>>, vector<32x128xbf16>
    %1 = arith.extf %0 : vector<32x128xbf16> to vector<32x128xf32>
    %c0_1 = arith.constant 0 : index
    %c0_2 = arith.constant 0 : index
    %2 = vector.load %arg2[%c0_1, %c0_2] : memref<1x128xf32, #tpu.memory_space<vmem>>, vector<1x128xf32>
    %3 = vector.broadcast %2 : vector<1x128xf32> to vector<32x128xf32>
    %4 = arith.mulf %1, %3 : vector<32x128xf32>
    %c0_3 = arith.constant 0 : index
    %c0_4 = arith.constant 0 : index
    %5 = vector.load %arg3[%c0_3, %c0_4] : memref<1x128xf32, #tpu.memory_space<vmem>>, vector<1x128xf32>
    %6 = vector.broadcast %5 : vector<1x128xf32> to vector<32x128xf32>
    %7 = arith.addf %4, %6 : vector<32x128xf32>
    %c0_5 = arith.constant 0 : index
    %c0_6 = arith.constant 0 : index
    %8 = vector.load %arg4[%c0_5, %c0_6] : memref<32x128xf32, #tpu.memory_space<vmem>>, vector<32x128xf32>
    tpu.vector_store %arg4[%c0_5, %c0_6], %7 {strides = array<i32>} : memref<32x128xf32, #tpu.memory_space<vmem>>, vector<32x128xf32>,
    return
  }
  func.func @transform_0(%arg0: i32) -> (i32, i32) {
    %c0_i32 = arith.constant 0 : i32
    %c0_i32_0 = arith.constant 0 : i32
    return %arg0, %c0_i32 : i32, i32
  }
  func.func @transform_1(%arg0: i32) -> (i32, i32) {
    %c0_i32 = arith.constant 0 : i32
    %c0_i32_0 = arith.constant 0 : i32
    %c0_i32_1 = arith.constant 0 : i32
    return %c0_i32, %c0_i32_0 : i32, i32
  }
  func.func @transform_2(%arg0: i32) -> (i32, i32) {
    %c0_i32 = arith.constant 0 : i32
    %c0_i32_0 = arith.constant 0 : i32
    %c0_i32_1 = arith.constant 0 : i32
    return %c0_i32, %c0_i32_0 : i32, i32
  }
  func.func @transform_3(%arg0: i32) -> (i32, i32) {
    %c0_i32 = arith.constant 0 : i32
    %c0_i32_0 = arith.constant 0 : i32
    return %arg0, %c0_i32 : i32, i32
  }
}

</mosaic_0001>

<llo_original>
// kernel: up_block_forward.5
$region0: #{up_block_forward.5}
  #allocation0 [shape = 'u32[]', space=smem, size = 0x4, offset = 0x4, fixed_abs, tag = 'smem constant byte address 0x4 - core index']
  #allocation1 [shape = 'u32[144,128]{1,0:T(1,128)}', space=vmem, size = 0x12000, scoped, tag = 'internal scratch']
  #allocation2 [shape = 'f32[18,192]{1,0:T(8,128)}', space=vmem, size = 0x6000, scoped, tag = 'scratch operand']
  %s0 = inlined_call_operand.vmem [shape: f32[2,8,64], index: 0, kind: input, shape index: {}]
  %s1 = inlined_call_operand.vmem [shape: f32[2,16,64], index: 1, kind: input, shape index: {}]
  %s2 = inlined_call_operand.vmem [shape: bf16[16,8], index: 2, kind: input, shape index: {}]
  %s3 = inlined_call_operand.vmem [shape: bf16[64,128], index: 3, kind: input, shape index: {}]
  %s4 = inlined_call_operand.vmem [shape: bf16[3,192,128], index: 4, kind: input, shape index: {}]
  %s5 = inlined_call_operand.vmem [shape: bf16[2,16,128], index: 5, kind: output, shape index: {0}]
  %s6 = inlined_call_operand.vmem [shape: f32[2,2,128], index: 6, kind: output, shape index: {1}]
  %7 = xla_tuple %s5, %s6
  %s8 = sld [smem:[#allocation0]]
  $region61: #{up_block_forward.5} parent=0
    _
  %s10 = ssub.s32 1, %s8
  %s11 = scalar_select 0, %s10, %s8
  loop: start=0, step=1, limit=4
  $region2: #{up_block_forward.5} parent=0 // loop_pre_header
    _
  $region3: #{up_block_forward.5} parent=0 // loop_header
    %s13 = sphi 0, %s17
    %p14 = scmp.ge.s32.totalorder %s13, 4
    %s23 = sphi 0, %s25
    %s26 = sphi 0, %s23
    %s27 = sphi 0, %s26
    %s43 = sphi 0, %s27
    %s49 = sphi 0, %s51
    %s52 = sphi 0, %s49
    %s53 = sphi 0, %s52
    %s69 = sphi 0, %s53
    %s73 = sphi 0, %s73
    %s75 = sphi 0, %s73
    %s76 = sphi 0, %s75
    %s90 = sphi 0, %s76
    %s94 = sphi 0, %s94
    %s96 = sphi 0, %s94
    %s97 = sphi 0, %s96
    %s111 = sphi 0, %s97
    %s115 = sphi 0, %s115
    %s117 = sphi 0, %s115
    %s118 = sphi 0, %s117
    %s132 = sphi 0, %s118
    %s138 = sphi 0, %s140
    %s141 = sphi 0, %s138
    %s142 = sphi 0, %s141
    %s158 = sphi 0, %s142
    %s164 = sphi 0, %s166
    %s167 = sphi 0, %s164
    %s168 = sphi 0, %s167
    %s184 = sphi 0, %s168
  $region4: #{up_block_forward.5} parent=0 // loop_header_branch
    %16 = sbr.rel (%p14) target = $region8
  $region5: #{up_block_forward.5} parent=0 // loop_body
    %s18 = ssub.s32 %s13, 1
    %s19 = ssub.s32 %s13, 2
    %s20 = sadd.s32 %s13, 1
    %s21 = ssub.s32 %s13, %s20
    %p22 = scmp.eq.s32.totalorder %s21, 0
    %s24 = sadd.s32 %s23, 1
    %s25 = scalar_select %p22, %s23, %s24
    %p28 = pneg %p22
    %p29 = scmp.eq.s32.totalorder %s13, 1
    %p30 = por %p28, %p29
    %p31 = scmp.ne.s32.totalorder %s23, %s26
    %p32 = scmp.eq.s32.totalorder %s13, 0
    %p33 = por %p31, %p32
    %p34 = scmp.ne.s32.totalorder %s23, %s26
    %p35 = scmp.eq.s32.totalorder %s18, 1
    %p36 = por %p34, %p35
    %p37 = scmp.ne.s32.totalorder %s26, %s27
    %p38 = scmp.eq.s32.totalorder %s18, 0
    %p39 = por %p37, %p38
    %p40 = scmp.ne.s32.totalorder %s26, %s27
    %p41 = scmp.eq.s32.totalorder %s19, 1
    %p42 = por %p40, %p41
    %p44 = scmp.ne.s32.totalorder %s27, %s43
    %p45 = scmp.eq.s32.totalorder %s19, 0
    %p46 = por %p44, %p45
    %s47 = ssub.s32 %s13, %s20
    %p48 = scmp.eq.s32.totalorder %s47, 0
    %s50 = sadd.s32 %s49, 1
    %s51 = scalar_select %p48, %s49, %s50
    %p54 = pneg %p48
    %p55 = scmp.eq.s32.totalorder %s13, 1
    %p56 = por %p54, %p55
    %p57 = scmp.ne.s32.totalorder %s49, %s52
    %p58 = scmp.eq.s32.totalorder %s13, 0
    %p59 = por %p57, %p58
    %p60 = scmp.ne.s32.totalorder %s49, %s52
    %p61 = scmp.eq.s32.totalorder %s18, 1
    %p62 = por %p60, %p61
    %p63 = scmp.ne.s32.totalorder %s52, %s53
    %p64 = scmp.eq.s32.totalorder %s18, 0
    %p65 = por %p63, %p64
    %p66 = scmp.ne.s32.totalorder %s52, %s53
    %p67 = scmp.eq.s32.totalorder %s19, 1
    %p68 = por %p66, %p67
    %p70 = scmp.ne.s32.totalorder %s53, %s69
    %p71 = scmp.eq.s32.totalorder %s19, 0
    %p72 = por %p70, %p71
    %s74 = sadd.s32 %s73, 1
    %p77 = scmp.eq.s32.totalorder %s13, 1
    %p78 = scmp.ne.s32.totalorder %s73, %s75
    %p79 = scmp.eq.s32.totalorder %s13, 0
    %p80 = por %p78, %p79
    %p81 = scmp.ne.s32.totalorder %s73, %s75
    %p82 = scmp.eq.s32.totalorder %s18, 1
    %p83 = por %p81, %p82
    %p84 = scmp.ne.s32.totalorder %s75, %s76
    %p85 = scmp.eq.s32.totalorder %s18, 0
    %p86 = por %p84, %p85
    %p87 = scmp.ne.s32.totalorder %s75, %s76
    %p88 = scmp.eq.s32.totalorder %s19, 1
    %p89 = por %p87, %p88
    %p91 = scmp.ne.s32.totalorder %s76, %s90
    %p92 = scmp.eq.s32.totalorder %s19, 0
    %p93 = por %p91, %p92
    %s95 = sadd.s32 %s94, 1
    %p98 = scmp.eq.s32.totalorder %s13, 1
    %p99 = scmp.ne.s32.totalorder %s94, %s96
    %p100 = scmp.eq.s32.totalorder %s13, 0
    %p101 = por %p99, %p100
    %p102 = scmp.ne.s32.totalorder %s94, %s96
    %p103 = scmp.eq.s32.totalorder %s18, 1
    %p104 = por %p102, %p103
    %p105 = scmp.ne.s32.totalorder %s96, %s97
    %p106 = scmp.eq.s32.totalorder %s18, 0
    %p107 = por %p105, %p106
    %p108 = scmp.ne.s32.totalorder %s96, %s97
    %p109 = scmp.eq.s32.totalorder %s19, 1
    %p110 = por %p108, %p109
    %p112 = scmp.ne.s32.totalorder %s97, %s111
    %p113 = scmp.eq.s32.totalorder %s19, 0
    %p114 = por %p112, %p113
    %s116 = sadd.s32 %s115, 1
    %p119 = scmp.eq.s32.totalorder %s13, 1
    %p120 = scmp.ne.s32.totalorder %s115, %s117
    %p121 = scmp.eq.s32.totalorder %s13, 0
    %p122 = por %p120, %p121
    %p123 = scmp.ne.s32.totalorder %s115, %s117
    %p124 = scmp.eq.s32.totalorder %s18, 1
    %p125 = por %p123, %p124
    %p126 = scmp.ne.s32.totalorder %s117, %s118
    %p127 = scmp.eq.s32.totalorder %s18, 0
    %p128 = por %p126, %p127
    %p129 = scmp.ne.s32.totalorder %s117, %s118
    %p130 = scmp.eq.s32.totalorder %s19, 1
    %p131 = por %p129, %p130
    %p133 = scmp.ne.s32.totalorder %s118, %s132
    %p134 = scmp.eq.s32.totalorder %s19, 0
    %p135 = por %p133, %p134
    %s136 = ssub.s32 %s13, %s20
    %p137 = scmp.eq.s32.totalorder %s136, 0
    %s139 = sadd.s32 %s138, 1
    %s140 = scalar_select %p137, %s138, %s139
    %p143 = pneg %p137
    %p144 = scmp.eq.s32.totalorder %s13, 1
    %p145 = por %p143, %p144
    %p146 = scmp.ne.s32.totalorder %s138, %s141
    %p147 = scmp.eq.s32.totalorder %s13, 0
    %p148 = por %p146, %p147
    %p149 = scmp.ne.s32.totalorder %s138, %s141
    %p150 = scmp.eq.s32.totalorder %s18, 1
    %p151 = por %p149, %p150
    %p152 = scmp.ne.s32.totalorder %s141, %s142
    %p153 = scmp.eq.s32.totalorder %s18, 0
    %p154 = por %p152, %p153
    %p155 = scmp.ne.s32.totalorder %s141, %s142
    %p156 = scmp.eq.s32.totalorder %s19, 1
    %p157 = por %p155, %p156
    %p159 = scmp.ne.s32.totalorder %s142, %s158
    %p160 = scmp.eq.s32.totalorder %s19, 0
    %p161 = por %p159, %p160
    %s162 = ssub.s32 %s13, %s20
    %p163 = scmp.eq.s32.totalorder %s162, 0
    %s165 = sadd.s32 %s164, 1
    %s166 = scalar_select %p163, %s164, %s165
    %p169 = pneg %p163
    %p170 = scmp.eq.s32.totalorder %s13, 1
    %p171 = por %p169, %p170
    %p172 = scmp.ne.s32.totalorder %s164, %s167
    %p173 = scmp.eq.s32.totalorder %s13, 0
    %p174 = por %p172, %p173
    %p175 = scmp.ne.s32.totalorder %s164, %s167
    %p176 = scmp.eq.s32.totalorder %s18, 1
    %p177 = por %p175, %p176
    %p178 = scmp.ne.s32.totalorder %s167, %s168
    %p179 = scmp.eq.s32.totalorder %s18, 0
    %p180 = por %p178, %p179
    %p181 = scmp.ne.s32.totalorder %s167, %s168
    %p182 = scmp.eq.s32.totalorder %s19, 1
    %p183 = por %p181, %p182
    %p185 = scmp.ne.s32.totalorder %s168, %s184
    %p186 = scmp.eq.s32.totalorder %s19, 0
    %p187 = por %p185, %p186
    %p188 = scmp.le.s32.totalorder 1, %s13
    %p189 = scmp.lt.s32.totalorder %s13, 3
    %p190 = pnand %p188, %p189
    %p191 = pneg %p190
    // Predicated region
    $region9: #{up_block_forward.5} parent=5 // pred_check
      _
    $region10: #{up_block_forward.5} parent=5 // pred_check_branch
      %193 = sbr.rel (%p190) target = $region12
    $region11: #{up_block_forward.5} parent=5 // pred_region
      %s194 = ssub.s32 %s13, 1
      // Predicated region
      $region13: #{up_block_forward.5} parent=11 // pred_check
        %p195 = pneg %p86
      $region14: #{up_block_forward.5} parent=11 // pred_check_branch
        %197 = sbr.rel (%p195) target = $region16
      $region15: #{up_block_forward.5} parent=11 // pred_region
        _
      $region16: #{up_block_forward.5} parent=11 // pred_fallthru
        _
      // Predicated region
      $region17: #{up_block_forward.5} parent=11 // pred_check
        %p198 = pneg %p107
      $region18: #{up_block_forward.5} parent=11 // pred_check_branch
        %200 = sbr.rel (%p198) target = $region20
      $region19: #{up_block_forward.5} parent=11 // pred_region
        _
      $region20: #{up_block_forward.5} parent=11 // pred_fallthru
        _
      // Predicated region
      $region21: #{up_block_forward.5} parent=11 // pred_check
        %p201 = pneg %p128
      $region22: #{up_block_forward.5} parent=11 // pred_check_branch
        %203 = sbr.rel (%p201) target = $region24
      $region23: #{up_block_forward.5} parent=11 // pred_region
        _
      $region24: #{up_block_forward.5} parent=11 // pred_fallthru
        _
    $region12: #{up_block_forward.5} parent=5 // pred_fallthru
      _
    %p204 = scmp.lt.s32.totalorder %s13, 2
    // Predicated region
    $region25: #{up_block_forward.5} parent=5 // pred_check
      %p205 = pneg %p204
    $region26: #{up_block_forward.5} parent=5 // pred_check_branch
      %207 = sbr.rel (%p205) target = $region28
    $region27: #{up_block_forward.5} parent=5 // pred_region
      // Predicated region
      $region29: #{up_block_forward.5} parent=27 // pred_check
        %p208 = pneg %p33
      $region30: #{up_block_forward.5} parent=27 // pred_check_branch
        %210 = sbr.rel (%p208) target = $region32
      $region31: #{up_block_forward.5} parent=27 // pred_region
        %p211 = scmp.lt.s32.totalorder %s13, 1
        %s212 = scalar_select %p211, %s13, 1
        %s213 = smul.addr %s212, 8
        %s214 = scalar_lea.vmem %s0, %s213
      $region32: #{up_block_forward.5} parent=27 // pred_fallthru
        _
      // Predicated region
      $region33: #{up_block_forward.5} parent=27 // pred_check
        %p215 = pneg %p59
      $region34: #{up_block_forward.5} parent=27 // pred_check_branch
        %217 = sbr.rel (%p215) target = $region36
      $region35: #{up_block_forward.5} parent=27 // pred_region
        %p218 = scmp.lt.s32.totalorder %s13, 1
        %s219 = scalar_select %p218, %s13, 1
        %s220 = smul.addr %s219, 2
        %s221 = smul.addr %s220, 8
        %s222 = scalar_lea.vmem %s1, %s221
      $region36: #{up_block_forward.5} parent=27 // pred_fallthru
        _
    $region28: #{up_block_forward.5} parent=5 // pred_fallthru
      _
    %p223 = scmp.le.s32.totalorder 1, %s13
    %p224 = scmp.lt.s32.totalorder %s13, 3
    %p225 = pnand %p223, %p224
    %p226 = pneg %p225
    // Predicated region
    $region37: #{up_block_forward.5} parent=5 // pred_check
      _
    $region38: #{up_block_forward.5} parent=5 // pred_check_branch
      %228 = sbr.rel (%p225) target = $region40
    $region39: #{up_block_forward.5} parent=5 // pred_region
      %s229 = ssub.s32 %s13, 1
      %p230 = scmp.lt.s32.totalorder %s18, 1
      %s231 = scalar_select %p230, %s18, 1
      %s232 = smul.addr %s231, 8
      %s233 = scalar_lea.vmem %s0, %s232
      %p234 = pneg %p39
      %p235 = pneg %p36
      %p236 = scmp.lt.s32.totalorder %s18, 1
      %s237 = scalar_select %p236, %s18, 1
      %s238 = smul.addr %s237, 2
      %s239 = smul.addr %s238, 8
      %s240 = scalar_lea.vmem %s1, %s239
      %p241 = pneg %p65
      %p242 = pneg %p62
      %p243 = pneg %p86
      %p244 = pneg %p83
      %p245 = pneg %p107
      %p246 = pneg %p104
      %p247 = pneg %p128
      %p248 = pneg %p125
      %p249 = pneg %p154
      %p250 = pneg %p151
      %p251 = scmp.lt.s32.totalorder %s18, 1
      %s252 = scalar_select %p251, %s18, 1
      %s253 = smul.addr %s252, 2
      %s254 = smul.addr %s253, 4
      %s255 = scalar_lea.vmem %s5, %s254
      %p256 = pneg %p180
      %p257 = pneg %p177
      %p258 = scmp.lt.s32.totalorder %s18, 1
      %s259 = scalar_select %p258, %s18, 1
      %s260 = smul.addr %s259, 2
      %s261 = scalar_lea.vmem %s6, %s260
      %p262 = scmp.lt.s32.totalorder %s18, 1
      %s263 = scalar_select %p262, %s18, 1
      %s264 = smul.addr %s263, 8
      %s265 = scalar_lea.vmem %s0, %s264
      %p266 = scmp.lt.s32.totalorder %s18, 1
      %s267 = scalar_select %p266, %s18, 1
      %s268 = smul.addr %s267, 2
      %s269 = smul.addr %s268, 8
      %s270 = scalar_lea.vmem %s1, %s269
      %p271 = scmp.lt.s32.totalorder %s18, 1
      %s272 = scalar_select %p271, %s18, 1
      %s273 = smul.addr %s272, 2
      %s274 = smul.addr %s273, 4
      %s275 = scalar_lea.vmem %s5, %s274
      %p276 = scmp.lt.s32.totalorder %s18, 1
      %s277 = scalar_select %p276, %s18, 1
      %s278 = smul.addr %s277, 2
      %s279 = scalar_lea.vmem %s6, %s278
      %v281 = vlaneseq
      %vm282 = vcmp.ge.s32.totalorder %v281, 0
      %vm283 = vcmp.lt.s32.totalorder %v281, 192
      %vm284 = vmand %vm282, %vm283
      %285 = vst.msk [vmem:[#allocation2] ss:$8 sm:$0x3] %vm284, 0.0
      %286 = vst.msk [vmem:[#allocation2] ss:$8 sm:$0x0] %vm284, 0.0
      %s287 = scalar_lea.vmem [#allocation2], 33
      %288 = vst.msk [vmem:[%s287] ss:$8 sm:$0x3] %vm284, 0.0
      %289 = vst.msk [vmem:[%s287] ss:$8 sm:$0x0] %vm284, 0.0
      %v290 = vld [vmem:[%s265] sm:$0xff]
      %v291 = vpack.c.bf16 %v290, %v290
      %v292 = vld [vmem:[%s2] sm:$0xf]
      %v293 = vld [vmem:[%s2 + $0x4] sm:$0xf]
      %v296 = vunpack.c.l.b16 %v292
      %v297 = vunpack.c.l.b16 %v293
      %v298 = vpack.c.b16 %v297, %v296
      %vm299 = vcmask 64512
      %v301 = vsel %vm299, %v298, 0
      %vm303 = vcmask 1043456
      %v305 = vsel %vm303, %v291, 0
      %307 = vmatprep.subr.bf16.mxu0 0
      %308 = vmatpush1.bf16.msra.mxu0 0
      %309 = vmatprep.subr.bf16.mxu0 0
      %310 = vmatpush1.bf16.msra.mxu0 0
      %311 = vmatprep.subr.bf16.mxu0 0
      %312 = vmatpush1.bf16.msra.mxu0 0
      %313 = vmatprep.subr.bf16.mxu0 0
      %314 = vmatpush1.bf16.msra.mxu0 0
      %315 = vmatprep.subr.bf16.mxu0 0
      %316 = vmatpush1.bf16.msra.mxu0 0
      %317 = vmatprep.subr.bf16.mxu0 0
      %318 = vmatpush1.bf16.msra.mxu0 0
      %319 = vmatprep.subr.bf16.mxu0 0
      %320 = vmatpush1.bf16.msra.mxu0 0
      %321 = vmatprep.subr.bf16.mxu0 0
      %322 = vmatpush1.bf16.msra.mxu0 %v305
      %323 = vmatprep.subr.bf16.mxu0 0
      %324 = vmatpush2.bf16.msra.mxu0 0
      %325 = vmatprep.subr.bf16.mxu0 0
      %326 = vmatpush2.bf16.msra.mxu0 0
      %327 = vmatprep.subr.bf16.mxu0 0
      %328 = vmatpush2.bf16.msra.mxu0 0
      %329 = vmatprep.subr.bf16.mxu0 0
      %330 = vmatpush2.bf16.msra.mxu0 0
      %331 = vmatprep.subr.bf16.mxu0 0
      %332 = vmatpush2.bf16.msra.mxu0 0
      %333 = vmatprep.subr.bf16.mxu0 0
      %334 = vmatpush2.bf16.msra.mxu0 0
      %335 = vmatprep.subr.bf16.mxu0 0
      %336 = vmatpush2.bf16.msra.mxu0 0
      %337 = vmatprep.subr.bf16.mxu0 0
      %338 = vmatpush2.bf16.msra.mxu0 0
      %339 = vmatprep.mubr.bf16.mxu0 0
      %340 = vmatmul.mubr.bf16.gmra.mxu0 %v301
      %v341 = vpop.f32.mrf.mxu0
      %v342 = vadd.f32 0.0, %v341
      %v343 = vpop.f32.mrf.mxu0
      %v344 = vpop.f32.mrf.mxu0
      %v345 = vadd.f32 0.0, %v344
      %v346 = vpop.f32.mrf.mxu0
      %347 = vdwg.mxu0
      %v348 = vpack.c.bf16 %v345, %v342
      %v349 = vld [vmem:[%s3] sm:$0xf]
      %v350 = vld [vmem:[%s3 + $0x4] sm:$0xf]
      %v351 = vld [vmem:[%s3 + $0x8] sm:$0xf]
      %v352 = vld [vmem:[%s3 + $0xc] sm:$0xf]
      %v353 = vld [vmem:[%s3 + $0x10] sm:$0xf]
      %v354 = vld [vmem:[%s3 + $0x14] sm:$0xf]
      %v355 = vld [vmem:[%s3 + $0x18] sm:$0xf]
      %v356 = vld [vmem:[%s3 + $0x1c] sm:$0xf]
      %v365 = vunpack.c.l.b16 %v349
      %v366 = vunpack.c.l.b16 %v350
      %v367 = vunpack.c.l.b16 %v351
      %v368 = vunpack.c.l.b16 %v352
      %v369 = vunpack.c.l.b16 %v353
      %v370 = vunpack.c.l.b16 %v354
      %v371 = vunpack.c.l.b16 %v355
      %v372 = vunpack.c.l.b16 %v356
      %v373 = vpack.c.b16 %v366, %v365
      %v374 = vpack.c.b16 %v368, %v367
      %v375 = vpack.c.b16 %v370, %v369
      %v376 = vpack.c.b16 %v372, %v371
      %vm381 = vcmask 523264
      %v383 = vsel %vm381, %v348, 0
      %385 = vmatprep.subr.bf16.mxu0 0
      %386 = vmatpush1.bf16.msra.mxu0 0
      %387 = vmatprep.subr.bf16.mxu0 0
      %388 = vmatpush1.bf16.msra.mxu0 0
      %389 = vmatprep.subr.bf16.mxu0 0
      %390 = vmatpush1.bf16.msra.mxu0 0
      %391 = vmatprep.subr.bf16.mxu0 0
      %392 = vmatpush1.bf16.msra.mxu0 0
      %393 = vmatprep.subr.bf16.mxu0 0
      %394 = vmatpush1.bf16.msra.mxu0 %v376
      %395 = vmatprep.subr.bf16.mxu0 0
      %396 = vmatpush1.bf16.msra.mxu0 %v375
      %397 = vmatprep.subr.bf16.mxu0 0
      %398 = vmatpush1.bf16.msra.mxu0 %v374
      %399 = vmatprep.subr.bf16.mxu0 0
      %400 = vmatpush1.bf16.msra.mxu0 %v373
      %401 = vmatprep.subr.bf16.mxu0 0
      %402 = vmatpush2.bf16.msra.mxu0 0
      %403 = vmatprep.subr.bf16.mxu0 0
      %404 = vmatpush2.bf16.msra.mxu0 0
      %405 = vmatprep.subr.bf16.mxu0 0
      %406 = vmatpush2.bf16.msra.mxu0 0
      %407 = vmatprep.subr.bf16.mxu0 0
      %408 = vmatpush2.bf16.msra.mxu0 0
      %409 = vmatprep.subr.bf16.mxu0 0
      %410 = vmatpush2.bf16.msra.mxu0 0
      %411 = vmatprep.subr.bf16.mxu0 0
      %412 = vmatpush2.bf16.msra.mxu0 0
      %413 = vmatprep.subr.bf16.mxu0 0
      %414 = vmatpush2.bf16.msra.mxu0 0
      %415 = vmatprep.subr.bf16.mxu0 0
      %416 = vmatpush2.bf16.msra.mxu0 0
      %417 = vmatprep.mubr.bf16.mxu0 0
      %418 = vmatmul.mubr.bf16.gmra.mxu0 %v383
      %v419 = vpop.f32.mrf.mxu0
      %v420 = vadd.f32 0.0, %v419
      %v421 = vpop.f32.mrf.mxu0
      %v422 = vpop.f32.mrf.mxu0
      %v423 = vadd.f32 0.0, %v422
      %v424 = vpop.f32.mrf.mxu0
      %425 = vdwg.mxu0
      %vm428 = vcmask 1040384
      %v429 = vrot.slane %v420, 7
      %v430 = vrot.slane %v423, 7
      %v431 = vsel %vm428, %v429, %v430
      %435 = vst [vmem:[#allocation2] sm:$0xfe] %v429
      %436 = vst [vmem:[#allocation2 + $0x10] sm:$0xff] %v431
      %437 = vst [vmem:[#allocation2 + $0x20] sm:$0x1] %v430
      %v438 = vld [vmem:[%s270] sm:$0xff]
      %v439 = vld [vmem:[%s270 + $0x8] sm:$0xff]
      %v442 = vrot.slane %v438, 7
      %v443 = vrot.slane %v439, 7
      %v444 = vsel %vm428, %v442, %v443
      %vm448 = vcmask 523265
      %449 = vst.msk [vmem:[#allocation2 + $0x8] sm:$0xfe] %vm448, %v442
      %450 = vst.msk [vmem:[#allocation2 + $0x18] sm:$0xff] %vm381, %v444
      %vm451 = vcmask 516096
      %452 = vst.msk [vmem:[#allocation2 + $0x28] sm:$0x1] %vm451, %v443
      %v453 = vld [vmem:[#allocation2] sm:$0xff]
      %v454 = vld [vmem:[#allocation2 + $0x8] sm:$0xff]
      %v455 = vld [vmem:[#allocation2 + $0x10] sm:$0xff]
      %v456 = vld [vmem:[#allocation2 + $0x18] sm:$0xff]
      %v457 = vpack.c.bf16 %v455, %v453
      %v458 = vpack.c.bf16 %v456, %v454
      %v459 = vld [vmem:[%s4] sm:$0xf]
      %v460 = vld [vmem:[%s4 + $0x4] sm:$0xf]
      %v461 = vld [vmem:[%s4 + $0x8] sm:$0xf]
      %v462 = vld [vmem:[%s4 + $0xc] sm:$0xf]
      %v463 = vld [vmem:[%s4 + $0x10] sm:$0xf]
      %v464 = vld [vmem:[%s4 + $0x14] sm:$0xf]
      %v465 = vld [vmem:[%s4 + $0x18] sm:$0xf]
      %v466 = vld [vmem:[%s4 + $0x1c] sm:$0xf]
      %v467 = vld [vmem:[%s4 + $0x20] sm:$0xf]
      %v468 = vld [vmem:[%s4 + $0x24] sm:$0xf]
      %v469 = vld [vmem:[%s4 + $0x28] sm:$0xf]
      %v470 = vld [vmem:[%s4 + $0x2c] sm:$0xf]
      %v471 = vld [vmem:[%s4 + $0x30] sm:$0xf]
      %v472 = vld [vmem:[%s4 + $0x34] sm:$0xf]
      %v473 = vld [vmem:[%s4 + $0x38] sm:$0xf]
      %v474 = vld [vmem:[%s4 + $0x3c] sm:$0xf]
      %v475 = vld [vmem:[%s4 + $0x40] sm:$0xf]
      %v476 = vld [vmem:[%s4 + $0x44] sm:$0xf]
      %v477 = vld [vmem:[%s4 + $0x48] sm:$0xf]
      %v478 = vld [vmem:[%s4 + $0x4c] sm:$0xf]
      %v479 = vld [vmem:[%s4 + $0x50] sm:$0xf]
      %v480 = vld [vmem:[%s4 + $0x54] sm:$0xf]
      %v481 = vld [vmem:[%s4 + $0x58] sm:$0xf]
      %v482 = vld [vmem:[%s4 + $0x5c] sm:$0xf]
      %v483 = vld [vmem:[#allocation2] sm:$0xfe]
      %v484 = vld [vmem:[#allocation2 + $0x8] sm:$0xfe]
      %v485 = vld [vmem:[#allocation2 + $0x20] sm:$0x1]
      %v486 = vld [vmem:[#allocation2 + $0x28] sm:$0x1]
      %v487 = vpack.c.bf16 %v455, %v483
      %v488 = vpack.c.bf16 %v456, %v484
      %v489 = vpack.c.bf16 %v485, %v485
      %v490 = vpack.c.bf16 %v486, %v486
      %s491 = scalar_lea.vmem %s4, 96
      %v492 = vld [vmem:[%s491] sm:$0xf]
      %v493 = vld [vmem:[%s491 + $0x4] sm:$0xf]
      %v494 = vld [vmem:[%s491 + $0x8] sm:$0xf]
      %v495 = vld [vmem:[%s491 + $0xc] sm:$0xf]
      %v496 = vld [vmem:[%s491 + $0x10] sm:$0xf]
      %v497 = vld [vmem:[%s491 + $0x14] sm:$0xf]
      %v498 = vld [vmem:[%s491 + $0x18] sm:$0xf]
      %v499 = vld [vmem:[%s491 + $0x1c] sm:$0xf]
      %v500 = vld [vmem:[%s491 + $0x20] sm:$0xf]
      %v501 = vld [vmem:[%s491 + $0x24] sm:$0xf]
      %v502 = vld [vmem:[%s491 + $0x28] sm:$0xf]
      %v503 = vld [vmem:[%s491 + $0x2c] sm:$0xf]
      %v504 = vld [vmem:[%s491 + $0x30] sm:$0xf]
      %v505 = vld [vmem:[%s491 + $0x34] sm:$0xf]
      %v506 = vld [vmem:[%s491 + $0x38] sm:$0xf]
      %v507 = vld [vmem:[%s491 + $0x3c] sm:$0xf]
      %v508 = vld [vmem:[%s491 + $0x40] sm:$0xf]
      %v509 = vld [vmem:[%s491 + $0x44] sm:$0xf]
      %v510 = vld [vmem:[%s491 + $0x48] sm:$0xf]
      %v511 = vld [vmem:[%s491 + $0x4c] sm:$0xf]
      %v512 = vld [vmem:[%s491 + $0x50] sm:$0xf]
      %v513 = vld [vmem:[%s491 + $0x54] sm:$0xf]
      %v514 = vld [vmem:[%s491 + $0x58] sm:$0xf]
      %v515 = vld [vmem:[%s491 + $0x5c] sm:$0xf]
      %vm516 = vsmask.f32 7424
      %v518 = vshrl.u32 %v487, 16
      %v520 = vshll.u32 %v487, 16
      %v522 = vrot.slane %v520, 1
      %v523 = vor.u32 %v518, %v522
      %v525 = vshll.u32 %v489, 16
      %v527 = vrot.slane %v525, 1
      %v528 = vsel %vm516, %v523, %v527
      %v530 = vshrl.u32 %v488, 16
      %v532 = vshll.u32 %v488, 16
      %v534 = vrot.slane %v532, 1
      %v535 = vor.u32 %v530, %v534
      %v537 = vshll.u32 %v490, 16
      %v539 = vrot.slane %v537, 1
      %v540 = vsel %vm516, %v535, %v539
      %v566 = vunpack.c.l.b16 %v492
      %v567 = vunpack.c.l.b16 %v493
      %v568 = vunpack.c.l.b16 %v494
      %v569 = vunpack.c.l.b16 %v495
      %v570 = vunpack.c.l.b16 %v496
      %v571 = vunpack.c.l.b16 %v497
      %v572 = vunpack.c.l.b16 %v498
      %v573 = vunpack.c.l.b16 %v499
      %v574 = vunpack.c.l.b16 %v500
      %v575 = vunpack.c.l.b16 %v501
      %v576 = vunpack.c.l.b16 %v502
      %v577 = vunpack.c.l.b16 %v503
      %v578 = vunpack.c.l.b16 %v504
      %v579 = vunpack.c.l.b16 %v505
      %v580 = vunpack.c.l.b16 %v506
      %v581 = vunpack.c.l.b16 %v507
      %v582 = vunpack.c.l.b16 %v508
      %v583 = vunpack.c.l.b16 %v509
      %v584 = vunpack.c.l.b16 %v510
      %v585 = vunpack.c.l.b16 %v511
      %v586 = vunpack.c.l.b16 %v512
      %v587 = vunpack.c.l.b16 %v513
      %v588 = vunpack.c.l.b16 %v514
      %v589 = vunpack.c.l.b16 %v515
      %v590 = vpack.c.b16 %v567, %v566
      %v591 = vpack.c.b16 %v569, %v568
      %v592 = vpack.c.b16 %v571, %v570
      %v593 = vpack.c.b16 %v573, %v572
      %v594 = vpack.c.b16 %v575, %v574
      %v595 = vpack.c.b16 %v577, %v576
      %v596 = vpack.c.b16 %v579, %v578
      %v597 = vpack.c.b16 %v581, %v580
      %v598 = vpack.c.b16 %v583, %v582
      %v599 = vpack.c.b16 %v585, %v584
      %v600 = vpack.c.b16 %v587, %v586
      %v601 = vpack.c.b16 %v589, %v588
      %v615 = vsel %vm381, %v540, 0
      %617 = vmatprep.subr.bf16.mxu0 0
      %618 = vmatpush1.bf16.msra.mxu0 %v597
      %619 = vmatprep.subr.bf16.mxu0 0
      %620 = vmatpush1.bf16.msra.mxu0 %v596
      %621 = vmatprep.subr.bf16.mxu0 0
      %622 = vmatpush1.bf16.msra.mxu0 %v595
      %623 = vmatprep.subr.bf16.mxu0 0
      %624 = vmatpush1.bf16.msra.mxu0 %v594
      %625 = vmatprep.subr.bf16.mxu0 0
      %626 = vmatpush1.bf16.msra.mxu0 %v593
      %627 = vmatprep.subr.bf16.mxu0 0
      %628 = vmatpush1.bf16.msra.mxu0 %v592
      %629 = vmatprep.subr.bf16.mxu0 0
      %630 = vmatpush1.bf16.msra.mxu0 %v591
      %631 = vmatprep.subr.bf16.mxu0 0
      %632 = vmatpush1.bf16.msra.mxu0 %v590
      %633 = vmatprep.subr.bf16.mxu0 0
      %634 = vmatpush2.bf16.msra.mxu0 0
      %635 = vmatprep.subr.bf16.mxu0 0
      %636 = vmatpush2.bf16.msra.mxu0 0
      %637 = vmatprep.subr.bf16.mxu0 0
      %638 = vmatpush2.bf16.msra.mxu0 0
      %639 = vmatprep.subr.bf16.mxu0 0
      %640 = vmatpush2.bf16.msra.mxu0 0
      %641 = vmatprep.subr.bf16.mxu0 0
      %642 = vmatpush2.bf16.msra.mxu0 %v601
      %643 = vmatprep.subr.bf16.mxu0 0
      %644 = vmatpush2.bf16.msra.mxu0 %v600
      %645 = vmatprep.subr.bf16.mxu0 0
      %646 = vmatpush2.bf16.msra.mxu0 %v599
      %647 = vmatprep.subr.bf16.mxu0 0
      %648 = vmatpush2.bf16.msra.mxu0 %v598
      %649 = vmatprep.mubr.bf16.mxu0 %v615
      %650 = vmatmul.mubr.bf16.gmra.mxu0 %v528
      %v651 = vpop.f32.mrf.mxu0
      %v652 = vadd.f32 0.0, %v651
      %v653 = vpop.f32.mrf.mxu0
      %v654 = vpop.f32.mrf.mxu0
      %v655 = vadd.f32 0.0, %v654
      %v656 = vpop.f32.mrf.mxu0
      %657 = vdwg.mxu0
      %v682 = vunpack.c.l.b16 %v459
      %v683 = vunpack.c.l.b16 %v460
      %v684 = vunpack.c.l.b16 %v461
      %v685 = vunpack.c.l.b16 %v462
      %v686 = vunpack.c.l.b16 %v463
      %v687 = vunpack.c.l.b16 %v464
      %v688 = vunpack.c.l.b16 %v465
      %v689 = vunpack.c.l.b16 %v466
      %v690 = vunpack.c.l.b16 %v467
      %v691 = vunpack.c.l.b16 %v468
      %v692 = vunpack.c.l.b16 %v469
      %v693 = vunpack.c.l.b16 %v470
      %v694 = vunpack.c.l.b16 %v471
      %v695 = vunpack.c.l.b16 %v472
      %v696 = vunpack.c.l.b16 %v473
      %v697 = vunpack.c.l.b16 %v474
      %v698 = vunpack.c.l.b16 %v475
      %v699 = vunpack.c.l.b16 %v476
      %v700 = vunpack.c.l.b16 %v477
      %v701 = vunpack.c.l.b16 %v478
      %v702 = vunpack.c.l.b16 %v479
      %v703 = vunpack.c.l.b16 %v480
      %v704 = vunpack.c.l.b16 %v481
      %v705 = vunpack.c.l.b16 %v482
      %v706 = vpack.c.b16 %v683, %v682
      %v707 = vpack.c.b16 %v685, %v684
      %v708 = vpack.c.b16 %v687, %v686
      %v709 = vpack.c.b16 %v689, %v688
      %v710 = vpack.c.b16 %v691, %v690
      %v711 = vpack.c.b16 %v693, %v692
      %v712 = vpack.c.b16 %v695, %v694
      %v713 = vpack.c.b16 %v697, %v696
      %v714 = vpack.c.b16 %v699, %v698
      %v715 = vpack.c.b16 %v701, %v700
      %v716 = vpack.c.b16 %v703, %v702
      %v717 = vpack.c.b16 %v705, %v704
      %v731 = vsel %vm381, %v458, 0
      %733 = vmatprep.subr.bf16.mxu0 0
      %734 = vmatpush1.bf16.msra.mxu0 %v713
      %735 = vmatprep.subr.bf16.mxu0 0
      %736 = vmatpush1.bf16.msra.mxu0 %v712
      %737 = vmatprep.subr.bf16.mxu0 0
      %738 = vmatpush1.bf16.msra.mxu0 %v711
      %739 = vmatprep.subr.bf16.mxu0 0
      %740 = vmatpush1.bf16.msra.mxu0 %v710
      %741 = vmatprep.subr.bf16.mxu0 0
      %742 = vmatpush1.bf16.msra.mxu0 %v709
      %743 = vmatprep.subr.bf16.mxu0 0
      %744 = vmatpush1.bf16.msra.mxu0 %v708
      %745 = vmatprep.subr.bf16.mxu0 0
      %746 = vmatpush1.bf16.msra.mxu0 %v707
      %747 = vmatprep.subr.bf16.mxu0 0
      %748 = vmatpush1.bf16.msra.mxu0 %v706
      %749 = vmatprep.subr.bf16.mxu0 0
      %750 = vmatpush2.bf16.msra.mxu0 0
      %751 = vmatprep.subr.bf16.mxu0 0
      %752 = vmatpush2.bf16.msra.mxu0 0
      %753 = vmatprep.subr.bf16.mxu0 0
      %754 = vmatpush2.bf16.msra.mxu0 0
      %755 = vmatprep.subr.bf16.mxu0 0
      %756 = vmatpush2.bf16.msra.mxu0 0
      %757 = vmatprep.subr.bf16.mxu0 0
      %758 = vmatpush2.bf16.msra.mxu0 %v717
      %759 = vmatprep.subr.bf16.mxu0 0
      %760 = vmatpush2.bf16.msra.mxu0 %v716
      %761 = vmatprep.subr.bf16.mxu0 0
      %762 = vmatpush2.bf16.msra.mxu0 %v715
      %763 = vmatprep.subr.bf16.mxu0 0
      %764 = vmatpush2.bf16.msra.mxu0 %v714
      %765 = vmatprep.mubr.bf16.mxu0 %v731
      %766 = vmatmul.mubr.bf16.gmra.mxu0 %v457
      %v767 = vpop.f32.mrf.mxu0
      %v768 = vadd.f32 %v652, %v767
      %v769 = vpop.f32.mrf.mxu0
      %v770 = vpop.f32.mrf.mxu0
      %v771 = vadd.f32 %v655, %v770
      %v772 = vpop.f32.mrf.mxu0
      %773 = vdwg.mxu0
      %v774 = vld [vmem:[#allocation2] sm:$0xfc]
      %v775 = vld [vmem:[#allocation2 + $0x8] sm:$0xfc]
      %v776 = vld [vmem:[#allocation2 + $0x20] sm:$0x3]
      %v777 = vld [vmem:[#allocation2 + $0x28] sm:$0x3]
      %v778 = vpack.c.bf16 %v455, %v774
      %v779 = vpack.c.bf16 %v456, %v775
      %v780 = vpack.c.bf16 %v776, %v776
      %v781 = vpack.c.bf16 %v777, %v777
      %s782 = scalar_lea.vmem %s4, 192
      %v783 = vld [vmem:[%s782] sm:$0xf]
      %v784 = vld [vmem:[%s782 + $0x4] sm:$0xf]
      %v785 = vld [vmem:[%s782 + $0x8] sm:$0xf]
      %v786 = vld [vmem:[%s782 + $0xc] sm:$0xf]
      %v787 = vld [vmem:[%s782 + $0x10] sm:$0xf]
      %v788 = vld [vmem:[%s782 + $0x14] sm:$0xf]
      %v789 = vld [vmem:[%s782 + $0x18] sm:$0xf]
      %v790 = vld [vmem:[%s782 + $0x1c] sm:$0xf]
      %v791 = vld [vmem:[%s782 + $0x20] sm:$0xf]
      %v792 = vld [vmem:[%s782 + $0x24] sm:$0xf]
      %v793 = vld [vmem:[%s782 + $0x28] sm:$0xf]
      %v794 = vld [vmem:[%s782 + $0x2c] sm:$0xf]
      %v795 = vld [vmem:[%s782 + $0x30] sm:$0xf]
      %v796 = vld [vmem:[%s782 + $0x34] sm:$0xf]
      %v797 = vld [vmem:[%s782 + $0x38] sm:$0xf]
      %v798 = vld [vmem:[%s782 + $0x3c] sm:$0xf]
      %v799 = vld [vmem:[%s782 + $0x40] sm:$0xf]
      %v800 = vld [vmem:[%s782 + $0x44] sm:$0xf]
      %v801 = vld [vmem:[%s782 + $0x48] sm:$0xf]
      %v802 = vld [vmem:[%s782 + $0x4c] sm:$0xf]
      %v803 = vld [vmem:[%s782 + $0x50] sm:$0xf]
      %v804 = vld [vmem:[%s782 + $0x54] sm:$0xf]
      %v805 = vld [vmem:[%s782 + $0x58] sm:$0xf]
      %v806 = vld [vmem:[%s782 + $0x5c] sm:$0xf]
      %vm811 = vcmask 1046528
      %v812 = vrot.slane %v778, 1
      %v813 = vrot.slane %v780, 1
      %v814 = vsel %vm811, %v812, %v813
      %v815 = vrot.slane %v779, 1
      %v816 = vrot.slane %v781, 1
      %v817 = vsel %vm811, %v815, %v816
      %v843 = vunpack.c.l.b16 %v783
      %v844 = vunpack.c.l.b16 %v784
      %v845 = vunpack.c.l.b16 %v785
      %v846 = vunpack.c.l.b16 %v786
      %v847 = vunpack.c.l.b16 %v787
      %v848 = vunpack.c.l.b16 %v788
      %v849 = vunpack.c.l.b16 %v789
      %v850 = vunpack.c.l.b16 %v790
      %v851 = vunpack.c.l.b16 %v791
      %v852 = vunpack.c.l.b16 %v792
      %v853 = vunpack.c.l.b16 %v793
      %v854 = vunpack.c.l.b16 %v794
      %v855 = vunpack.c.l.b16 %v795
      %v856 = vunpack.c.l.b16 %v796
      %v857 = vunpack.c.l.b16 %v797
      %v858 = vunpack.c.l.b16 %v798
      %v859 = vunpack.c.l.b16 %v799
      %v860 = vunpack.c.l.b16 %v800
      %v861 = vunpack.c.l.b16 %v801
      %v862 = vunpack.c.l.b16 %v802
      %v863 = vunpack.c.l.b16 %v803
      %v864 = vunpack.c.l.b16 %v804
      %v865 = vunpack.c.l.b16 %v805
      %v866 = vunpack.c.l.b16 %v806
      %v867 = vpack.c.b16 %v844, %v843
      %v868 = vpack.c.b16 %v846, %v845
      %v869 = vpack.c.b16 %v848, %v847
      %v870 = vpack.c.b16 %v850, %v849
      %v871 = vpack.c.b16 %v852, %v851
      %v872 = vpack.c.b16 %v854, %v853
      %v873 = vpack.c.b16 %v856, %v855
      %v874 = vpack.c.b16 %v858, %v857
      %v875 = vpack.c.b16 %v860, %v859
      %v876 = vpack.c.b16 %v862, %v861
      %v877 = vpack.c.b16 %v864, %v863
      %v878 = vpack.c.b16 %v866, %v865
      %v892 = vsel %vm381, %v817, 0
      %894 = vmatprep.subr.bf16.mxu0 0
      %895 = vmatpush1.bf16.msra.mxu0 %v874
      %896 = vmatprep.subr.bf16.mxu0 0
      %897 = vmatpush1.bf16.msra.mxu0 %v873
      %898 = vmatprep.subr.bf16.mxu0 0
      %899 = vmatpush1.bf16.msra.mxu0 %v872
      %900 = vmatprep.subr.bf16.mxu0 0
      %901 = vmatpush1.bf16.msra.mxu0 %v871
      %902 = vmatprep.subr.bf16.mxu0 0
      %903 = vmatpush1.bf16.msra.mxu0 %v870
      %904 = vmatprep.subr.bf16.mxu0 0
      %905 = vmatpush1.bf16.msra.mxu0 %v869
      %906 = vmatprep.subr.bf16.mxu0 0
      %907 = vmatpush1.bf16.msra.mxu0 %v868
      %908 = vmatprep.subr.bf16.mxu0 0
      %909 = vmatpush1.bf16.msra.mxu0 %v867
      %910 = vmatprep.subr.bf16.mxu0 0
      %911 = vmatpush2.bf16.msra.mxu0 0
      %912 = vmatprep.subr.bf16.mxu0 0
      %913 = vmatpush2.bf16.msra.mxu0 0
      %914 = vmatprep.subr.bf16.mxu0 0
      %915 = vmatpush2.bf16.msra.mxu0 0
      %916 = vmatprep.subr.bf16.mxu0 0
      %917 = vmatpush2.bf16.msra.mxu0 0
      %918 = vmatprep.subr.bf16.mxu0 0
      %919 = vmatpush2.bf16.msra.mxu0 %v878
      %920 = vmatprep.subr.bf16.mxu0 0
      %921 = vmatpush2.bf16.msra.mxu0 %v877
      %922 = vmatprep.subr.bf16.mxu0 0
      %923 = vmatpush2.bf16.msra.mxu0 %v876
      %924 = vmatprep.subr.bf16.mxu0 0
      %925 = vmatpush2.bf16.msra.mxu0 %v875
      %926 = vmatprep.mubr.bf16.mxu0 %v892
      %927 = vmatmul.mubr.bf16.gmra.mxu0 %v814
      %v928 = vpop.f32.mrf.mxu0
      %v929 = vadd.f32 0.0, %v928
      %v930 = vpop.f32.mrf.mxu0
      %v931 = vpop.f32.mrf.mxu0
      %v932 = vadd.f32 0.0, %v931
      %v933 = vpop.f32.mrf.mxu0
      %934 = vdwg.mxu0
      %v935 = vadd.f32 %v768, %v929
      %v936 = vadd.f32 %v771, %v932
      %v937 = vpack.c.bf16 %v936, %v935
      %v939 = vunpack.c.l.b16 %v937
      %v940 = vunpack.c.h.b16 %v937
      %v941 = vpack.c.b16 %v939, %v939
      %v942 = vpack.c.b16 %v940, %v940
      %945 = vst [vmem:[%s275] sm:$0xf] %v941
      %946 = vst [vmem:[%s275 + $0x4] sm:$0xf] %v942
      %v947 = vadd.f32 %v935, %v936
      %v948 = vrot.slane %v947, 4
      %v949 = vadd.f32 %v947, %v948
      %v950 = vrot.slane %v949, 2
      %v951 = vadd.f32 %v949, %v950
      %v952 = vrot.slane %v951, 1
      %v953 = vadd.f32 %v951, %v952
      %v954 = vmul.f32 %v935, %v935
      %v955 = vmul.f32 %v936, %v936
      %v956 = vadd.f32 %v954, %v955
      %v957 = vrot.slane %v956, 4
      %v958 = vadd.f32 %v956, %v957
      %v959 = vrot.slane %v958, 2
      %v960 = vadd.f32 %v958, %v959
      %v961 = vrot.slane %v960, 1
      %v962 = vadd.f32 %v960, %v961
      %v963 = vsel %vm428, %v953, %v962
      %964 = vst [vmem:[%s279] sm:$0x3] %v963
      %p965 = scmp.lt.s32.totalorder %s18, 1
      %s966 = scalar_select %p965, %s18, 1
      %s967 = smul.addr %s966, 2
      %s968 = smul.addr %s967, 4
      %s969 = scalar_lea.vmem %s5, %s968
      %p970 = scmp.lt.s32.totalorder %s18, 1
      %s971 = scalar_select %p970, %s18, 1
      %s972 = smul.addr %s971, 2
      %s973 = scalar_lea.vmem %s6, %s972
      // Predicated region
      $region41: #{up_block_forward.5} parent=39 // pred_check
        %p974 = pneg %p151
      $region42: #{up_block_forward.5} parent=39 // pred_check_branch
        %976 = sbr.rel (%p974) target = $region44
      $region43: #{up_block_forward.5} parent=39 // pred_region
        _
      $region44: #{up_block_forward.5} parent=39 // pred_fallthru
        _
      // Predicated region
      $region45: #{up_block_forward.5} parent=39 // pred_check
        %p977 = pneg %p177
      $region46: #{up_block_forward.5} parent=39 // pred_check_branch
        %979 = sbr.rel (%p977) target = $region48
      $region47: #{up_block_forward.5} parent=39 // pred_region
        _
      $region48: #{up_block_forward.5} parent=39 // pred_fallthru
        _
    $region40: #{up_block_forward.5} parent=5 // pred_fallthru
      _
    %p980 = scmp.le.s32.totalorder 2, %s13
    // Predicated region
    $region49: #{up_block_forward.5} parent=5 // pred_check
      %p981 = pneg %p980
    $region50: #{up_block_forward.5} parent=5 // pred_check_branch
      %983 = sbr.rel (%p981) target = $region52
    $region51: #{up_block_forward.5} parent=5 // pred_region
      %s984 = ssub.s32 %s13, 2
      // Predicated region
      $region53: #{up_block_forward.5} parent=51 // pred_check
        %p985 = pneg %p157
      $region54: #{up_block_forward.5} parent=51 // pred_check_branch
        %987 = sbr.rel (%p985) target = $region56
      $region55: #{up_block_forward.5} parent=51 // pred_region
        %p988 = scmp.lt.s32.totalorder %s19, 1
        %s989 = scalar_select %p988, %s19, 1
        %s990 = smul.addr %s989, 2
        %s991 = smul.addr %s990, 4
        %s992 = scalar_lea.vmem %s5, %s991
      $region56: #{up_block_forward.5} parent=51 // pred_fallthru
        _
      // Predicated region
      $region57: #{up_block_forward.5} parent=51 // pred_check
        %p993 = pneg %p183
      $region58: #{up_block_forward.5} parent=51 // pred_check_branch
        %995 = sbr.rel (%p993) target = $region60
      $region59: #{up_block_forward.5} parent=51 // pred_region
        %p996 = scmp.lt.s32.totalorder %s19, 1
        %s997 = scalar_select %p996, %s19, 1
        %s998 = smul.addr %s997, 2
        %s999 = scalar_lea.vmem %s6, %s998
      $region60: #{up_block_forward.5} parent=51 // pred_fallthru
        _
    $region52: #{up_block_forward.5} parent=5 // pred_fallthru
      _
  $region6: #{up_block_forward.5} parent=0 // loop_footer
    %s17 = sadd.s32 1, %s13
  $region7: #{up_block_forward.5} parent=0 // loop_footer_branch
    %12 = sbr.rel target = $region3
  $region8: #{up_block_forward.5} parent=0 // loop_exit
    _

// kernel: tile.48
$region0: #{tile.48}
  #allocation0 [shape = 's32[1]{0}', space=sflag, size = 0x4, scoped, tag = 'scoped memory for tile.48']
  %s0 = inlined_call_operand.vmem [shape: f32[8], index: 0, kind: input, shape index: {}]
  %s1 = inlined_call_operand.vmem [shape: f32[16,8], index: 1, kind: output, shape index: {}]
  // Predicated region
  $region2: #{tile.48} parent=0 // pred_check
    _
  $region3: #{tile.48} parent=0 // pred_check_branch
    %3 = sbr.rel (0) target = $region5
  $region4: #{tile.48} parent=0 // pred_region
    _
  $region5: #{tile.48} parent=0 // pred_fallthru
    _
  %v4 = vld [vmem:[%s0] ss:$0 sm:$0xff]
  %5 = vst [vmem:[%s1] sm:$0xff] %v4
  %s6 = scalar_lea.vmem %s1, 8
  %7 = vst [vmem:[%s6] sm:$0xff] %v4

// kernel: tile.49
$region0: #{tile.49}
  %s0 = inlined_call_operand.vmem [shape: f32[16,8], index: 0, kind: input, shape index: {}]
  %s1 = inlined_call_operand.vmem [shape: f32[1,128], index: 1, kind: output, shape index: {}]
  $region1: #{tile.49} parent=0
    #allocation0 [shape = 'u8[4096]{0}', space=vmem, size = 0x1000, scoped, tag = 'scoped mem for output reshape']
    %v2 = vld [vmem:[%s0] sm:$0x1]
    %vm3 = vcmask 64512
    %4 = vst.msk [vmem:[#allocation0] sm:$0x1] %vm3, %v2
    %s5 = scalar_lea.vmem %s0, 15
    %v6 = vld [vmem:[%s5] sm:$0x1]
    %7 = vrot.lane.b32.xlu0 %v6, 120
    %v8 = vpop.permute.xlu0 %7
    %vm9 = vcmask 1048512
    %10 = vst.msk [vmem:[#allocation0] sm:$0x1] %vm9, %v8
    %s11 = scalar_lea.vmem %s0, 14
    %v12 = vld [vmem:[%s11] sm:$0x1]
    %13 = vrot.lane.b32.xlu0 %v12, 112
    %v14 = vpop.permute.xlu0 %13
    %vm15 = vcmask 982912
    %16 = vst.msk [vmem:[#allocation0] sm:$0x1] %vm15, %v14
    %s17 = scalar_lea.vmem %s0, 13
    %v18 = vld [vmem:[%s17] sm:$0x1]
    %19 = vrot.lane.b32.xlu0 %v18, 104
    %v20 = vpop.permute.xlu0 %19
    %vm21 = vcmask 917312
    %22 = vst.msk [vmem:[#allocation0] sm:$0x1] %vm21, %v20
    %s23 = scalar_lea.vmem %s0, 12
    %v24 = vld [vmem:[%s23] sm:$0x1]
    %25 = vrot.lane.b32.xlu0 %v24, 96
    %v26 = vpop.permute.xlu0 %25
    %vm27 = vcmask 851712
    %28 = vst.msk [vmem:[#allocation0] sm:$0x1] %vm27, %v26
    %s29 = scalar_lea.vmem %s0, 11
    %v30 = vld [vmem:[%s29] sm:$0x1]
    %31 = vrot.lane.b32.xlu0 %v30, 88
    %v32 = vpop.permute.xlu0 %31
    %vm33 = vcmask 786112
    %34 = vst.msk [vmem:[#allocation0] sm:$0x1] %vm33, %v32
    %s35 = scalar_lea.vmem %s0, 10
    %v36 = vld [vmem:[%s35] sm:$0x1]
    %37 = vrot.lane.b32.xlu0 %v36, 80
    %v38 = vpop.permute.xlu0 %37
    %vm39 = vcmask 720512
    %40 = vst.msk [vmem:[#allocation0] sm:$0x1] %vm39, %v38
    %s41 = scalar_lea.vmem %s0, 9
    %v42 = vld [vmem:[%s41] sm:$0x1]
    %43 = vrot.lane.b32.xlu0 %v42, 72
    %v44 = vpop.permute.xlu0 %43
    %vm45 = vcmask 654912
    %46 = vst.msk [vmem:[#allocation0] sm:$0x1] %vm45, %v44
    %s47 = scalar_lea.vmem %s0, 8
    %v48 = vld [vmem:[%s47] sm:$0x1]
    %49 = vrot.lane.b32.xlu0 %v48, 64
    %v50 = vpop.permute.xlu0 %49
    %vm51 = vcmask 589312
    %52 = vst.msk [vmem:[#allocation0] sm:$0x1] %vm51, %v50
    %s53 = scalar_lea.vmem %s0, 7
    %v54 = vld [vmem:[%s53] sm:$0x1]
    %55 = vrot.lane.b32.xlu0 %v54, 56
    %v56 = vpop.permute.xlu0 %55
    %vm57 = vcmask 523712
    %58 = vst.msk [vmem:[#allocation0] sm:$0x1] %vm57, %v56
    %s59 = scalar_lea.vmem %s0, 6
    %v60 = vld [vmem:[%s59] sm:$0x1]
    %61 = vrot.lane.b32.xlu0 %v60, 48
    %v62 = vpop.permute.xlu0 %61
    %vm63 = vcmask 458112
    %64 = vst.msk [vmem:[#allocation0] sm:$0x1] %vm63, %v62
    %s65 = scalar_lea.vmem %s0, 5
    %v66 = vld [vmem:[%s65] sm:$0x1]
    %67 = vrot.lane.b32.xlu0 %v66, 40
    %v68 = vpop.permute.xlu0 %67
    %vm69 = vcmask 392512
    %70 = vst.msk [vmem:[#allocation0] sm:$0x1] %vm69, %v68
    %s71 = scalar_lea.vmem %s0, 4
    %v72 = vld [vmem:[%s71] sm:$0x1]
    %73 = vrot.lane.b32.xlu0 %v72, 32
    %v74 = vpop.permute.xlu0 %73
    %vm75 = vcmask 326912
    %76 = vst.msk [vmem:[#allocation0] sm:$0x1] %vm75, %v74
    %s77 = scalar_lea.vmem %s0, 3
    %v78 = vld [vmem:[%s77] sm:$0x1]
    %79 = vrot.lane.b32.xlu0 %v78, 24
    %v80 = vpop.permute.xlu0 %79
    %vm81 = vcmask 261312
    %82 = vst.msk [vmem:[#allocation0] sm:$0x1] %vm81, %v80
    %s83 = scalar_lea.vmem %s0, 2
    %v84 = vld [vmem:[%s83] sm:$0x1]
    %85 = vrot.lane.b32.xlu0 %v84, 16
    %v86 = vpop.permute.xlu0 %85
    %vm87 = vcmask 195712
    %88 = vst.msk [vmem:[#allocation0] sm:$0x1] %vm87, %v86
    %s89 = scalar_lea.vmem %s0, 1
    %v90 = vld [vmem:[%s89] sm:$0x1]
    %91 = vrot.lane.b32.xlu0 %v90, 8
    %v92 = vpop.permute.xlu0 %91
    %vm93 = vcmask 130112
    %94 = vst.msk [vmem:[#allocation0] sm:$0x1] %vm93, %v92
    %s96 = sshll.u32 1, 1
    %s97 = ssub.s32 %s96, 1
    %v99 = vld [vmem:[#allocation0] sm:%s97]
    %s100 = sshll.u32 1, 1
    %s101 = ssub.s32 %s100, 1
    %102 = vst [vmem:[%s1] sm:%s101] %v99

// kernel: up_block_forward.7
$region0: #{up_block_forward.7}
  #allocation0 [shape = 'u32[]', space=smem, size = 0x4, offset = 0x4, fixed_abs, tag = 'smem constant byte address 0x4 - core index']
  #allocation1 [shape = 'u32[144,128]{1,0:T(1,128)}', space=vmem, size = 0x12000, scoped, tag = 'internal scratch']
  #allocation2 [shape = 'f32[18,128]{1,0:T(8,128)}', space=vmem, size = 0x3000, scoped, tag = 'scratch operand']
  %s0 = inlined_call_operand.vmem [shape: bf16[2,16,128], index: 0, kind: input, shape index: {}]
  %s1 = inlined_call_operand.vmem [shape: f32[1,128], index: 1, kind: input, shape index: {}]
  %s2 = inlined_call_operand.vmem [shape: f32[1,128], index: 2, kind: input, shape index: {}]
  %s3 = inlined_call_operand.vmem [shape: bf16[3,128,128], index: 3, kind: input, shape index: {}]
  %s4 = inlined_call_operand.vmem [shape: bf16[2,16,128], index: 4, kind: output, shape index: {0}]
  %s5 = inlined_call_operand.vmem [shape: f32[2,2,128], index: 5, kind: output, shape index: {1}]
  %6 = xla_tuple %s4, %s5
  %s7 = sld [smem:[#allocation0]]
  $region57: #{up_block_forward.7} parent=0
    _
  %s9 = ssub.s32 1, %s7
  %s10 = scalar_select 0, %s9, %s7
  loop: start=0, step=1, limit=4
  $region2: #{up_block_forward.7} parent=0 // loop_pre_header
    _
  $region3: #{up_block_forward.7} parent=0 // loop_header
    %s12 = sphi 0, %s16
    %p13 = scmp.ge.s32.totalorder %s12, 4
    %s22 = sphi 0, %s24
    %s25 = sphi 0, %s22
    %s26 = sphi 0, %s25
    %s42 = sphi 0, %s26
    %s46 = sphi 0, %s46
    %s48 = sphi 0, %s46
    %s49 = sphi 0, %s48
    %s63 = sphi 0, %s49
    %s67 = sphi 0, %s67
    %s69 = sphi 0, %s67
    %s70 = sphi 0, %s69
    %s84 = sphi 0, %s70
    %s88 = sphi 0, %s88
    %s90 = sphi 0, %s88
    %s91 = sphi 0, %s90
    %s105 = sphi 0, %s91
    %s111 = sphi 0, %s113
    %s114 = sphi 0, %s111
    %s115 = sphi 0, %s114
    %s131 = sphi 0, %s115
    %s137 = sphi 0, %s139
    %s140 = sphi 0, %s137
    %s141 = sphi 0, %s140
    %s157 = sphi 0, %s141
  $region4: #{up_block_forward.7} parent=0 // loop_header_branch
    %15 = sbr.rel (%p13) target = $region8
  $region5: #{up_block_forward.7} parent=0 // loop_body
    %s17 = ssub.s32 %s12, 1
    %s18 = ssub.s32 %s12, 2
    %s19 = sadd.s32 %s12, 1
    %s20 = ssub.s32 %s12, %s19
    %p21 = scmp.eq.s32.totalorder %s20, 0
    %s23 = sadd.s32 %s22, 1
    %s24 = scalar_select %p21, %s22, %s23
    %p27 = pneg %p21
    %p28 = scmp.eq.s32.totalorder %s12, 1
    %p29 = por %p27, %p28
    %p30 = scmp.ne.s32.totalorder %s22, %s25
    %p31 = scmp.eq.s32.totalorder %s12, 0
    %p32 = por %p30, %p31
    %p33 = scmp.ne.s32.totalorder %s22, %s25
    %p34 = scmp.eq.s32.totalorder %s17, 1
    %p35 = por %p33, %p34
    %p36 = scmp.ne.s32.totalorder %s25, %s26
    %p37 = scmp.eq.s32.totalorder %s17, 0
    %p38 = por %p36, %p37
    %p39 = scmp.ne.s32.totalorder %s25, %s26
    %p40 = scmp.eq.s32.totalorder %s18, 1
    %p41 = por %p39, %p40
    %p43 = scmp.ne.s32.totalorder %s26, %s42
    %p44 = scmp.eq.s32.totalorder %s18, 0
    %p45 = por %p43, %p44
    %s47 = sadd.s32 %s46, 1
    %p50 = scmp.eq.s32.totalorder %s12, 1
    %p51 = scmp.ne.s32.totalorder %s46, %s48
    %p52 = scmp.eq.s32.totalorder %s12, 0
    %p53 = por %p51, %p52
    %p54 = scmp.ne.s32.totalorder %s46, %s48
    %p55 = scmp.eq.s32.totalorder %s17, 1
    %p56 = por %p54, %p55
    %p57 = scmp.ne.s32.totalorder %s48, %s49
    %p58 = scmp.eq.s32.totalorder %s17, 0
    %p59 = por %p57, %p58
    %p60 = scmp.ne.s32.totalorder %s48, %s49
    %p61 = scmp.eq.s32.totalorder %s18, 1
    %p62 = por %p60, %p61
    %p64 = scmp.ne.s32.totalorder %s49, %s63
    %p65 = scmp.eq.s32.totalorder %s18, 0
    %p66 = por %p64, %p65
    %s68 = sadd.s32 %s67, 1
    %p71 = scmp.eq.s32.totalorder %s12, 1
    %p72 = scmp.ne.s32.totalorder %s67, %s69
    %p73 = scmp.eq.s32.totalorder %s12, 0
    %p74 = por %p72, %p73
    %p75 = scmp.ne.s32.totalorder %s67, %s69
    %p76 = scmp.eq.s32.totalorder %s17, 1
    %p77 = por %p75, %p76
    %p78 = scmp.ne.s32.totalorder %s69, %s70
    %p79 = scmp.eq.s32.totalorder %s17, 0
    %p80 = por %p78, %p79
    %p81 = scmp.ne.s32.totalorder %s69, %s70
    %p82 = scmp.eq.s32.totalorder %s18, 1
    %p83 = por %p81, %p82
    %p85 = scmp.ne.s32.totalorder %s70, %s84
    %p86 = scmp.eq.s32.totalorder %s18, 0
    %p87 = por %p85, %p86
    %s89 = sadd.s32 %s88, 1
    %p92 = scmp.eq.s32.totalorder %s12, 1
    %p93 = scmp.ne.s32.totalorder %s88, %s90
    %p94 = scmp.eq.s32.totalorder %s12, 0
    %p95 = por %p93, %p94
    %p96 = scmp.ne.s32.totalorder %s88, %s90
    %p97 = scmp.eq.s32.totalorder %s17, 1
    %p98 = por %p96, %p97
    %p99 = scmp.ne.s32.totalorder %s90, %s91
    %p100 = scmp.eq.s32.totalorder %s17, 0
    %p101 = por %p99, %p100
    %p102 = scmp.ne.s32.totalorder %s90, %s91
    %p103 = scmp.eq.s32.totalorder %s18, 1
    %p104 = por %p102, %p103
    %p106 = scmp.ne.s32.totalorder %s91, %s105
    %p107 = scmp.eq.s32.totalorder %s18, 0
    %p108 = por %p106, %p107
    %s109 = ssub.s32 %s12, %s19
    %p110 = scmp.eq.s32.totalorder %s109, 0
    %s112 = sadd.s32 %s111, 1
    %s113 = scalar_select %p110, %s111, %s112
    %p116 = pneg %p110
    %p117 = scmp.eq.s32.totalorder %s12, 1
    %p118 = por %p116, %p117
    %p119 = scmp.ne.s32.totalorder %s111, %s114
    %p120 = scmp.eq.s32.totalorder %s12, 0
    %p121 = por %p119, %p120
    %p122 = scmp.ne.s32.totalorder %s111, %s114
    %p123 = scmp.eq.s32.totalorder %s17, 1
    %p124 = por %p122, %p123
    %p125 = scmp.ne.s32.totalorder %s114, %s115
    %p126 = scmp.eq.s32.totalorder %s17, 0
    %p127 = por %p125, %p126
    %p128 = scmp.ne.s32.totalorder %s114, %s115
    %p129 = scmp.eq.s32.totalorder %s18, 1
    %p130 = por %p128, %p129
    %p132 = scmp.ne.s32.totalorder %s115, %s131
    %p133 = scmp.eq.s32.totalorder %s18, 0
    %p134 = por %p132, %p133
    %s135 = ssub.s32 %s12, %s19
    %p136 = scmp.eq.s32.totalorder %s135, 0
    %s138 = sadd.s32 %s137, 1
    %s139 = scalar_select %p136, %s137, %s138
    %p142 = pneg %p136
    %p143 = scmp.eq.s32.totalorder %s12, 1
    %p144 = por %p142, %p143
    %p145 = scmp.ne.s32.totalorder %s137, %s140
    %p146 = scmp.eq.s32.totalorder %s12, 0
    %p147 = por %p145, %p146
    %p148 = scmp.ne.s32.totalorder %s137, %s140
    %p149 = scmp.eq.s32.totalorder %s17, 1
    %p150 = por %p148, %p149
    %p151 = scmp.ne.s32.totalorder %s140, %s141
    %p152 = scmp.eq.s32.totalorder %s17, 0
    %p153 = por %p151, %p152
    %p154 = scmp.ne.s32.totalorder %s140, %s141
    %p155 = scmp.eq.s32.totalorder %s18, 1
    %p156 = por %p154, %p155
    %p158 = scmp.ne.s32.totalorder %s141, %s157
    %p159 = scmp.eq.s32.totalorder %s18, 0
    %p160 = por %p158, %p159
    %p161 = scmp.le.s32.totalorder 1, %s12
    %p162 = scmp.lt.s32.totalorder %s12, 3
    %p163 = pnand %p161, %p162
    %p164 = pneg %p163
    // Predicated region
    $region9: #{up_block_forward.7} parent=5 // pred_check
      _
    $region10: #{up_block_forward.7} parent=5 // pred_check_branch
      %166 = sbr.rel (%p163) target = $region12
    $region11: #{up_block_forward.7} parent=5 // pred_region
      %s167 = ssub.s32 %s12, 1
      // Predicated region
      $region13: #{up_block_forward.7} parent=11 // pred_check
        %p168 = pneg %p59
      $region14: #{up_block_forward.7} parent=11 // pred_check_branch
        %170 = sbr.rel (%p168) target = $region16
      $region15: #{up_block_forward.7} parent=11 // pred_region
        _
      $region16: #{up_block_forward.7} parent=11 // pred_fallthru
        _
      // Predicated region
      $region17: #{up_block_forward.7} parent=11 // pred_check
        %p171 = pneg %p80
      $region18: #{up_block_forward.7} parent=11 // pred_check_branch
        %173 = sbr.rel (%p171) target = $region20
      $region19: #{up_block_forward.7} parent=11 // pred_region
        _
      $region20: #{up_block_forward.7} parent=11 // pred_fallthru
        _
      // Predicated region
      $region21: #{up_block_forward.7} parent=11 // pred_check
        %p174 = pneg %p101
      $region22: #{up_block_forward.7} parent=11 // pred_check_branch
        %176 = sbr.rel (%p174) target = $region24
      $region23: #{up_block_forward.7} parent=11 // pred_region
        _
      $region24: #{up_block_forward.7} parent=11 // pred_fallthru
        _
    $region12: #{up_block_forward.7} parent=5 // pred_fallthru
      _
    %p177 = scmp.lt.s32.totalorder %s12, 2
    // Predicated region
    $region25: #{up_block_forward.7} parent=5 // pred_check
      %p178 = pneg %p177
    $region26: #{up_block_forward.7} parent=5 // pred_check_branch
      %180 = sbr.rel (%p178) target = $region28
    $region27: #{up_block_forward.7} parent=5 // pred_region
      // Predicated region
      $region29: #{up_block_forward.7} parent=27 // pred_check
        %p181 = pneg %p32
      $region30: #{up_block_forward.7} parent=27 // pred_check_branch
        %183 = sbr.rel (%p181) target = $region32
      $region31: #{up_block_forward.7} parent=27 // pred_region
        %p184 = scmp.lt.s32.totalorder %s12, 1
        %s185 = scalar_select %p184, %s12, 1
        %s186 = smul.addr %s185, 2
        %s187 = smul.addr %s186, 4
        %s188 = scalar_lea.vmem %s0, %s187
      $region32: #{up_block_forward.7} parent=27 // pred_fallthru
        _
    $region28: #{up_block_forward.7} parent=5 // pred_fallthru
      _
    %p189 = scmp.le.s32.totalorder 1, %s12
    %p190 = scmp.lt.s32.totalorder %s12, 3
    %p191 = pnand %p189, %p190
    %p192 = pneg %p191
    // Predicated region
    $region33: #{up_block_forward.7} parent=5 // pred_check
      _
    $region34: #{up_block_forward.7} parent=5 // pred_check_branch
      %194 = sbr.rel (%p191) target = $region36
    $region35: #{up_block_forward.7} parent=5 // pred_region
      %s195 = ssub.s32 %s12, 1
      %p196 = scmp.lt.s32.totalorder %s17, 1
      %s197 = scalar_select %p196, %s17, 1
      %s198 = smul.addr %s197, 2
      %s199 = smul.addr %s198, 4
      %s200 = scalar_lea.vmem %s0, %s199
      %p201 = pneg %p38
      %p202 = pneg %p35
      %p203 = pneg %p59
      %p204 = pneg %p56
      %p205 = pneg %p80
      %p206 = pneg %p77
      %p207 = pneg %p101
      %p208 = pneg %p98
      %p209 = pneg %p127
      %p210 = pneg %p124
      %p211 = scmp.lt.s32.totalorder %s17, 1
      %s212 = scalar_select %p211, %s17, 1
      %s213 = smul.addr %s212, 2
      %s214 = smul.addr %s213, 4
      %s215 = scalar_lea.vmem %s4, %s214
      %p216 = pneg %p153
      %p217 = pneg %p150
      %p218 = scmp.lt.s32.totalorder %s17, 1
      %s219 = scalar_select %p218, %s17, 1
      %s220 = smul.addr %s219, 2
      %s221 = scalar_lea.vmem %s5, %s220
      %p222 = scmp.lt.s32.totalorder %s17, 1
      %s223 = scalar_select %p222, %s17, 1
      %s224 = smul.addr %s223, 2
      %s225 = smul.addr %s224, 4
      %s226 = scalar_lea.vmem %s0, %s225
      %p227 = scmp.lt.s32.totalorder %s17, 1
      %s228 = scalar_select %p227, %s17, 1
      %s229 = smul.addr %s228, 2
      %s230 = smul.addr %s229, 4
      %s231 = scalar_lea.vmem %s4, %s230
      %p232 = scmp.lt.s32.totalorder %s17, 1
      %s233 = scalar_select %p232, %s17, 1
      %s234 = smul.addr %s233, 2
      %s235 = scalar_lea.vmem %s5, %s234
      %237 = vst [vmem:[#allocation2] sm:$0x1] 0.0
      %238 = vst [vmem:[#allocation2 + $0x11] sm:$0x1] 0.0
      %v239 = vld [vmem:[%s226] sm:$0xf]
      %v240 = vld [vmem:[%s226 + $0x4] sm:$0xf]
      %v241 = vunpack.c.l.bf16 %v239
      %v242 = vunpack.c.l.bf16 %v240
      %v243 = vld [vmem:[%s1] sm:$0x1]
      %v245 = vlaneseq
      %v246 = vshrl.u32 %v245, 7
      %v247 = vsub.s32 0, %v246
      %v248 = vrot.slane %v243, %v247
      %v250 = vmul.f32 %v241, %v248
      %v251 = vmul.f32 %v242, %v248
      %v252 = vld [vmem:[%s2] sm:$0x1]
      %v254 = vlaneseq
      %v255 = vshrl.u32 %v254, 7
      %v256 = vsub.s32 0, %v255
      %v257 = vrot.slane %v252, %v256
      %v259 = vadd.f32 %v250, %v257
      %v260 = vadd.f32 %v251, %v257
      %261 = vst [vmem:[#allocation2 + $0x1] sm:$0xff] %v259
      %262 = vst [vmem:[#allocation2 + $0x9] sm:$0xff] %v260
      %v263 = vld [vmem:[#allocation2] sm:$0xff]
      %v264 = vld [vmem:[#allocation2 + $0x8] sm:$0xff]
      %v265 = vpack.c.bf16 %v264, %v263
      %v266 = vld [vmem:[%s3] sm:$0xf]
      %v267 = vld [vmem:[%s3 + $0x4] sm:$0xf]
      %v268 = vld [vmem:[%s3 + $0x8] sm:$0xf]
      %v269 = vld [vmem:[%s3 + $0xc] sm:$0xf]
      %v270 = vld [vmem:[%s3 + $0x10] sm:$0xf]
      %v271 = vld [vmem:[%s3 + $0x14] sm:$0xf]
      %v272 = vld [vmem:[%s3 + $0x18] sm:$0xf]
      %v273 = vld [vmem:[%s3 + $0x1c] sm:$0xf]
      %v274 = vld [vmem:[%s3 + $0x20] sm:$0xf]
      %v275 = vld [vmem:[%s3 + $0x24] sm:$0xf]
      %v276 = vld [vmem:[%s3 + $0x28] sm:$0xf]
      %v277 = vld [vmem:[%s3 + $0x2c] sm:$0xf]
      %v278 = vld [vmem:[%s3 + $0x30] sm:$0xf]
      %v279 = vld [vmem:[%s3 + $0x34] sm:$0xf]
      %v280 = vld [vmem:[%s3 + $0x38] sm:$0xf]
      %v281 = vld [vmem:[%s3 + $0x3c] sm:$0xf]
      %v282 = vld [vmem:[#allocation2 + $0x1] sm:$0xff]
      %v283 = vld [vmem:[#allocation2 + $0x9] sm:$0xff]
      %v284 = vpack.c.bf16 %v283, %v282
      %s285 = scalar_lea.vmem %s3, 64
      %v286 = vld [vmem:[%s285] sm:$0xf]
      %v287 = vld [vmem:[%s285 + $0x4] sm:$0xf]
      %v288 = vld [vmem:[%s285 + $0x8] sm:$0xf]
      %v289 = vld [vmem:[%s285 + $0xc] sm:$0xf]
      %v290 = vld [vmem:[%s285 + $0x10] sm:$0xf]
      %v291 = vld [vmem:[%s285 + $0x14] sm:$0xf]
      %v292 = vld [vmem:[%s285 + $0x18] sm:$0xf]
      %v293 = vld [vmem:[%s285 + $0x1c] sm:$0xf]
      %v294 = vld [vmem:[%s285 + $0x20] sm:$0xf]
      %v295 = vld [vmem:[%s285 + $0x24] sm:$0xf]
      %v296 = vld [vmem:[%s285 + $0x28] sm:$0xf]
      %v297 = vld [vmem:[%s285 + $0x2c] sm:$0xf]
      %v298 = vld [vmem:[%s285 + $0x30] sm:$0xf]
      %v299 = vld [vmem:[%s285 + $0x34] sm:$0xf]
      %v300 = vld [vmem:[%s285 + $0x38] sm:$0xf]
      %v301 = vld [vmem:[%s285 + $0x3c] sm:$0xf]
      %v318 = vunpack.c.l.b16 %v286
      %v319 = vunpack.c.l.b16 %v287
      %v320 = vunpack.c.l.b16 %v288
      %v321 = vunpack.c.l.b16 %v289
      %v322 = vunpack.c.l.b16 %v290
      %v323 = vunpack.c.l.b16 %v291
      %v324 = vunpack.c.l.b16 %v292
      %v325 = vunpack.c.l.b16 %v293
      %v326 = vunpack.c.l.b16 %v294
      %v327 = vunpack.c.l.b16 %v295
      %v328 = vunpack.c.l.b16 %v296
      %v329 = vunpack.c.l.b16 %v297
      %v330 = vunpack.c.l.b16 %v298
      %v331 = vunpack.c.l.b16 %v299
      %v332 = vunpack.c.l.b16 %v300
      %v333 = vunpack.c.l.b16 %v301
      %v334 = vpack.c.b16 %v319, %v318
      %v335 = vpack.c.b16 %v321, %v320
      %v336 = vpack.c.b16 %v323, %v322
      %v337 = vpack.c.b16 %v325, %v324
      %v338 = vpack.c.b16 %v327, %v326
      %v339 = vpack.c.b16 %v329, %v328
      %v340 = vpack.c.b16 %v331, %v330
      %v341 = vpack.c.b16 %v333, %v332
      %350 = vmatprep.subr.bf16.mxu0 0
      %351 = vmatpush1.bf16.msra.mxu0 %v341
      %352 = vmatprep.subr.bf16.mxu0 0
      %353 = vmatpush1.bf16.msra.mxu0 %v340
      %354 = vmatprep.subr.bf16.mxu0 0
      %355 = vmatpush1.bf16.msra.mxu0 %v339
      %356 = vmatprep.subr.bf16.mxu0 0
      %357 = vmatpush1.bf16.msra.mxu0 %v338
      %358 = vmatprep.subr.bf16.mxu0 0
      %359 = vmatpush1.bf16.msra.mxu0 %v337
      %360 = vmatprep.subr.bf16.mxu0 0
      %361 = vmatpush1.bf16.msra.mxu0 %v336
      %362 = vmatprep.subr.bf16.mxu0 0
      %363 = vmatpush1.bf16.msra.mxu0 %v335
      %364 = vmatprep.subr.bf16.mxu0 0
      %365 = vmatpush1.bf16.msra.mxu0 %v334
      %366 = vmatprep.subr.bf16.mxu0 0
      %367 = vmatpush2.bf16.msra.mxu0 0
      %368 = vmatprep.subr.bf16.mxu0 0
      %369 = vmatpush2.bf16.msra.mxu0 0
      %370 = vmatprep.subr.bf16.mxu0 0
      %371 = vmatpush2.bf16.msra.mxu0 0
      %372 = vmatprep.subr.bf16.mxu0 0
      %373 = vmatpush2.bf16.msra.mxu0 0
      %374 = vmatprep.subr.bf16.mxu0 0
      %375 = vmatpush2.bf16.msra.mxu0 0
      %376 = vmatprep.subr.bf16.mxu0 0
      %377 = vmatpush2.bf16.msra.mxu0 0
      %378 = vmatprep.subr.bf16.mxu0 0
      %379 = vmatpush2.bf16.msra.mxu0 0
      %380 = vmatprep.subr.bf16.mxu0 0
      %381 = vmatpush2.bf16.msra.mxu0 0
      %382 = vmatprep.mubr.bf16.mxu0 0
      %383 = vmatmul.mubr.bf16.gmra.mxu0 %v284
      %v384 = vpop.f32.mrf.mxu0
      %v385 = vadd.f32 0.0, %v384
      %v386 = vpop.f32.mrf.mxu0
      %v387 = vpop.f32.mrf.mxu0
      %v388 = vadd.f32 0.0, %v387
      %v389 = vpop.f32.mrf.mxu0
      %390 = vdwg.mxu0
      %v407 = vunpack.c.l.b16 %v266
      %v408 = vunpack.c.l.b16 %v267
      %v409 = vunpack.c.l.b16 %v268
      %v410 = vunpack.c.l.b16 %v269
      %v411 = vunpack.c.l.b16 %v270
      %v412 = vunpack.c.l.b16 %v271
      %v413 = vunpack.c.l.b16 %v272
      %v414 = vunpack.c.l.b16 %v273
      %v415 = vunpack.c.l.b16 %v274
      %v416 = vunpack.c.l.b16 %v275
      %v417 = vunpack.c.l.b16 %v276
      %v418 = vunpack.c.l.b16 %v277
      %v419 = vunpack.c.l.b16 %v278
      %v420 = vunpack.c.l.b16 %v279
      %v421 = vunpack.c.l.b16 %v280
      %v422 = vunpack.c.l.b16 %v281
      %v423 = vpack.c.b16 %v408, %v407
      %v424 = vpack.c.b16 %v410, %v409
      %v425 = vpack.c.b16 %v412, %v411
      %v426 = vpack.c.b16 %v414, %v413
      %v427 = vpack.c.b16 %v416, %v415
      %v428 = vpack.c.b16 %v418, %v417
      %v429 = vpack.c.b16 %v420, %v419
      %v430 = vpack.c.b16 %v422, %v421
      %439 = vmatprep.subr.bf16.mxu0 0
      %440 = vmatpush1.bf16.msra.mxu0 %v430
      %441 = vmatprep.subr.bf16.mxu0 0
      %442 = vmatpush1.bf16.msra.mxu0 %v429
      %443 = vmatprep.subr.bf16.mxu0 0
      %444 = vmatpush1.bf16.msra.mxu0 %v428
      %445 = vmatprep.subr.bf16.mxu0 0
      %446 = vmatpush1.bf16.msra.mxu0 %v427
      %447 = vmatprep.subr.bf16.mxu0 0
      %448 = vmatpush1.bf16.msra.mxu0 %v426
      %449 = vmatprep.subr.bf16.mxu0 0
      %450 = vmatpush1.bf16.msra.mxu0 %v425
      %451 = vmatprep.subr.bf16.mxu0 0
      %452 = vmatpush1.bf16.msra.mxu0 %v424
      %453 = vmatprep.subr.bf16.mxu0 0
      %454 = vmatpush1.bf16.msra.mxu0 %v423
      %455 = vmatprep.subr.bf16.mxu0 0
      %456 = vmatpush2.bf16.msra.mxu0 0
      %457 = vmatprep.subr.bf16.mxu0 0
      %458 = vmatpush2.bf16.msra.mxu0 0
      %459 = vmatprep.subr.bf16.mxu0 0
      %460 = vmatpush2.bf16.msra.mxu0 0
      %461 = vmatprep.subr.bf16.mxu0 0
      %462 = vmatpush2.bf16.msra.mxu0 0
      %463 = vmatprep.subr.bf16.mxu0 0
      %464 = vmatpush2.bf16.msra.mxu0 0
      %465 = vmatprep.subr.bf16.mxu0 0
      %466 = vmatpush2.bf16.msra.mxu0 0
      %467 = vmatprep.subr.bf16.mxu0 0
      %468 = vmatpush2.bf16.msra.mxu0 0
      %469 = vmatprep.subr.bf16.mxu0 0
      %470 = vmatpush2.bf16.msra.mxu0 0
      %471 = vmatprep.mubr.bf16.mxu0 0
      %472 = vmatmul.mubr.bf16.gmra.mxu0 %v265
      %v473 = vpop.f32.mrf.mxu0
      %v474 = vadd.f32 %v385, %v473
      %v475 = vpop.f32.mrf.mxu0
      %v476 = vpop.f32.mrf.mxu0
      %v477 = vadd.f32 %v388, %v476
      %v478 = vpop.f32.mrf.mxu0
      %479 = vdwg.mxu0
      %v480 = vld [vmem:[#allocation2 + $0x2] sm:$0xff]
      %v481 = vld [vmem:[#allocation2 + $0xa] sm:$0xff]
      %v482 = vpack.c.bf16 %v481, %v480
      %s483 = scalar_lea.vmem %s3, 128
      %v484 = vld [vmem:[%s483] sm:$0xf]
      %v485 = vld [vmem:[%s483 + $0x4] sm:$0xf]
      %v486 = vld [vmem:[%s483 + $0x8] sm:$0xf]
      %v487 = vld [vmem:[%s483 + $0xc] sm:$0xf]
      %v488 = vld [vmem:[%s483 + $0x10] sm:$0xf]
      %v489 = vld [vmem:[%s483 + $0x14] sm:$0xf]
      %v490 = vld [vmem:[%s483 + $0x18] sm:$0xf]
      %v491 = vld [vmem:[%s483 + $0x1c] sm:$0xf]
      %v492 = vld [vmem:[%s483 + $0x20] sm:$0xf]
      %v493 = vld [vmem:[%s483 + $0x24] sm:$0xf]
      %v494 = vld [vmem:[%s483 + $0x28] sm:$0xf]
      %v495 = vld [vmem:[%s483 + $0x2c] sm:$0xf]
      %v496 = vld [vmem:[%s483 + $0x30] sm:$0xf]
      %v497 = vld [vmem:[%s483 + $0x34] sm:$0xf]
      %v498 = vld [vmem:[%s483 + $0x38] sm:$0xf]
      %v499 = vld [vmem:[%s483 + $0x3c] sm:$0xf]
      %v516 = vunpack.c.l.b16 %v484
      %v517 = vunpack.c.l.b16 %v485
      %v518 = vunpack.c.l.b16 %v486
      %v519 = vunpack.c.l.b16 %v487
      %v520 = vunpack.c.l.b16 %v488
      %v521 = vunpack.c.l.b16 %v489
      %v522 = vunpack.c.l.b16 %v490
      %v523 = vunpack.c.l.b16 %v491
      %v524 = vunpack.c.l.b16 %v492
      %v525 = vunpack.c.l.b16 %v493
      %v526 = vunpack.c.l.b16 %v494
      %v527 = vunpack.c.l.b16 %v495
      %v528 = vunpack.c.l.b16 %v496
      %v529 = vunpack.c.l.b16 %v497
      %v530 = vunpack.c.l.b16 %v498
      %v531 = vunpack.c.l.b16 %v499
      %v532 = vpack.c.b16 %v517, %v516
      %v533 = vpack.c.b16 %v519, %v518
      %v534 = vpack.c.b16 %v521, %v520
      %v535 = vpack.c.b16 %v523, %v522
      %v536 = vpack.c.b16 %v525, %v524
      %v537 = vpack.c.b16 %v527, %v526
      %v538 = vpack.c.b16 %v529, %v528
      %v539 = vpack.c.b16 %v531, %v530
      %548 = vmatprep.subr.bf16.mxu0 0
      %549 = vmatpush1.bf16.msra.mxu0 %v539
      %550 = vmatprep.subr.bf16.mxu0 0
      %551 = vmatpush1.bf16.msra.mxu0 %v538
      %552 = vmatprep.subr.bf16.mxu0 0
      %553 = vmatpush1.bf16.msra.mxu0 %v537
      %554 = vmatprep.subr.bf16.mxu0 0
      %555 = vmatpush1.bf16.msra.mxu0 %v536
      %556 = vmatprep.subr.bf16.mxu0 0
      %557 = vmatpush1.bf16.msra.mxu0 %v535
      %558 = vmatprep.subr.bf16.mxu0 0
      %559 = vmatpush1.bf16.msra.mxu0 %v534
      %560 = vmatprep.subr.bf16.mxu0 0
      %561 = vmatpush1.bf16.msra.mxu0 %v533
      %562 = vmatprep.subr.bf16.mxu0 0
      %563 = vmatpush1.bf16.msra.mxu0 %v532
      %564 = vmatprep.subr.bf16.mxu0 0
      %565 = vmatpush2.bf16.msra.mxu0 0
      %566 = vmatprep.subr.bf16.mxu0 0
      %567 = vmatpush2.bf16.msra.mxu0 0
      %568 = vmatprep.subr.bf16.mxu0 0
      %569 = vmatpush2.bf16.msra.mxu0 0
      %570 = vmatprep.subr.bf16.mxu0 0
      %571 = vmatpush2.bf16.msra.mxu0 0
      %572 = vmatprep.subr.bf16.mxu0 0
      %573 = vmatpush2.bf16.msra.mxu0 0
      %574 = vmatprep.subr.bf16.mxu0 0
      %575 = vmatpush2.bf16.msra.mxu0 0
      %576 = vmatprep.subr.bf16.mxu0 0
      %577 = vmatpush2.bf16.msra.mxu0 0
      %578 = vmatprep.subr.bf16.mxu0 0
      %579 = vmatpush2.bf16.msra.mxu0 0
      %580 = vmatprep.mubr.bf16.mxu0 0
      %581 = vmatmul.mubr.bf16.gmra.mxu0 %v482
      %v582 = vpop.f32.mrf.mxu0
      %v583 = vadd.f32 0.0, %v582
      %v584 = vpop.f32.mrf.mxu0
      %v585 = vpop.f32.mrf.mxu0
      %v586 = vadd.f32 0.0, %v585
      %v587 = vpop.f32.mrf.mxu0
      %588 = vdwg.mxu0
      %v589 = vadd.f32 %v474, %v583
      %v590 = vadd.f32 %v477, %v586
      %v591 = vpack.c.bf16 %v590, %v589
      %v593 = vunpack.c.l.b16 %v591
      %v594 = vunpack.c.h.b16 %v591
      %v595 = vpack.c.b16 %v593, %v593
      %v596 = vpack.c.b16 %v594, %v594
      %599 = vst [vmem:[%s231] sm:$0xf] %v595
      %600 = vst [vmem:[%s231 + $0x4] sm:$0xf] %v596
      %v601 = vadd.f32 %v589, %v590
      %v602 = vrot.slane %v601, 4
      %v603 = vadd.f32 %v601, %v602
      %v604 = vrot.slane %v603, 2
      %v605 = vadd.f32 %v603, %v604
      %v606 = vrot.slane %v605, 1
      %v607 = vadd.f32 %v605, %v606
      %v608 = vmul.f32 %v589, %v589
      %v609 = vmul.f32 %v590, %v590
      %v610 = vadd.f32 %v608, %v609
      %v611 = vrot.slane %v610, 4
      %v612 = vadd.f32 %v610, %v611
      %v613 = vrot.slane %v612, 2
      %v614 = vadd.f32 %v612, %v613
      %v615 = vrot.slane %v614, 1
      %v616 = vadd.f32 %v614, %v615
      %vm617 = vcmask 1040384
      %v618 = vsel %vm617, %v607, %v616
      %619 = vst [vmem:[%s235] sm:$0x3] %v618
      %p620 = scmp.lt.s32.totalorder %s17, 1
      %s621 = scalar_select %p620, %s17, 1
      %s622 = smul.addr %s621, 2
      %s623 = smul.addr %s622, 4
      %s624 = scalar_lea.vmem %s4, %s623
      %p625 = scmp.lt.s32.totalorder %s17, 1
      %s626 = scalar_select %p625, %s17, 1
      %s627 = smul.addr %s626, 2
      %s628 = scalar_lea.vmem %s5, %s627
      // Predicated region
      $region37: #{up_block_forward.7} parent=35 // pred_check
        %p629 = pneg %p124
      $region38: #{up_block_forward.7} parent=35 // pred_check_branch
        %631 = sbr.rel (%p629) target = $region40
      $region39: #{up_block_forward.7} parent=35 // pred_region
        _
      $region40: #{up_block_forward.7} parent=35 // pred_fallthru
        _
      // Predicated region
      $region41: #{up_block_forward.7} parent=35 // pred_check
        %p632 = pneg %p150
      $region42: #{up_block_forward.7} parent=35 // pred_check_branch
        %634 = sbr.rel (%p632) target = $region44
      $region43: #{up_block_forward.7} parent=35 // pred_region
        _
      $region44: #{up_block_forward.7} parent=35 // pred_fallthru
        _
    $region36: #{up_block_forward.7} parent=5 // pred_fallthru
      _
    %p635 = scmp.le.s32.totalorder 2, %s12
    // Predicated region
    $region45: #{up_block_forward.7} parent=5 // pred_check
      %p636 = pneg %p635
    $region46: #{up_block_forward.7} parent=5 // pred_check_branch
      %638 = sbr.rel (%p636) target = $region48
    $region47: #{up_block_forward.7} parent=5 // pred_region
      %s639 = ssub.s32 %s12, 2
      // Predicated region
      $region49: #{up_block_forward.7} parent=47 // pred_check
        %p640 = pneg %p130
      $region50: #{up_block_forward.7} parent=47 // pred_check_branch
        %642 = sbr.rel (%p640) target = $region52
      $region51: #{up_block_forward.7} parent=47 // pred_region
        %p643 = scmp.lt.s32.totalorder %s18, 1
        %s644 = scalar_select %p643, %s18, 1
        %s645 = smul.addr %s644, 2
        %s646 = smul.addr %s645, 4
        %s647 = scalar_lea.vmem %s4, %s646
      $region52: #{up_block_forward.7} parent=47 // pred_fallthru
        _
      // Predicated region
      $region53: #{up_block_forward.7} parent=47 // pred_check
        %p648 = pneg %p156
      $region54: #{up_block_forward.7} parent=47 // pred_check_branch
        %650 = sbr.rel (%p648) target = $region56
      $region55: #{up_block_forward.7} parent=47 // pred_region
        %p651 = scmp.lt.s32.totalorder %s18, 1
        %s652 = scalar_select %p651, %s18, 1
        %s653 = smul.addr %s652, 2
        %s654 = scalar_lea.vmem %s5, %s653
      $region56: #{up_block_forward.7} parent=47 // pred_fallthru
        _
    $region48: #{up_block_forward.7} parent=5 // pred_fallthru
      _
  $region6: #{up_block_forward.7} parent=0 // loop_footer
    %s16 = sadd.s32 1, %s12
  $region7: #{up_block_forward.7} parent=0 // loop_footer_branch
    %11 = sbr.rel target = $region3
  $region8: #{up_block_forward.7} parent=0 // loop_exit
    _

// kernel: up_block_forward.6
$region0: #{up_block_forward.6}
  #allocation0 [shape = 'u32[]', space=smem, size = 0x4, offset = 0x4, fixed_abs, tag = 'smem constant byte address 0x4 - core index']
  #allocation1 [shape = 'u32[144,128]{1,0:T(1,128)}', space=vmem, size = 0x12000, scoped, tag = 'internal scratch']
  #allocation2 [shape = 'f32[18,128]{1,0:T(8,128)}', space=vmem, size = 0x3000, scoped, tag = 'scratch operand']
  %s0 = inlined_call_operand.vmem [shape: bf16[2,16,128], index: 0, kind: input, shape index: {}]
  %s1 = inlined_call_operand.vmem [shape: f32[1,128], index: 1, kind: input, shape index: {}]
  %s2 = inlined_call_operand.vmem [shape: f32[1,128], index: 2, kind: input, shape index: {}]
  %s3 = inlined_call_operand.vmem [shape: bf16[3,128,128], index: 3, kind: input, shape index: {}]
  %s4 = inlined_call_operand.vmem [shape: bf16[2,16,128], index: 4, kind: output, shape index: {0}]
  %s5 = inlined_call_operand.vmem [shape: f32[2,2,128], index: 5, kind: output, shape index: {1}]
  %6 = xla_tuple %s4, %s5
  %s7 = sld [smem:[#allocation0]]
  $region57: #{up_block_forward.6} parent=0
    _
  %s9 = ssub.s32 1, %s7
  %s10 = scalar_select 0, %s9, %s7
  loop: start=0, step=1, limit=4
  $region2: #{up_block_forward.6} parent=0 // loop_pre_header
    _
  $region3: #{up_block_forward.6} parent=0 // loop_header
    %s12 = sphi 0, %s16
    %p13 = scmp.ge.s32.totalorder %s12, 4
    %s22 = sphi 0, %s24
    %s25 = sphi 0, %s22
    %s26 = sphi 0, %s25
    %s42 = sphi 0, %s26
    %s46 = sphi 0, %s46
    %s48 = sphi 0, %s46
    %s49 = sphi 0, %s48
    %s63 = sphi 0, %s49
    %s67 = sphi 0, %s67
    %s69 = sphi 0, %s67
    %s70 = sphi 0, %s69
    %s84 = sphi 0, %s70
    %s88 = sphi 0, %s88
    %s90 = sphi 0, %s88
    %s91 = sphi 0, %s90
    %s105 = sphi 0, %s91
    %s111 = sphi 0, %s113
    %s114 = sphi 0, %s111
    %s115 = sphi 0, %s114
    %s131 = sphi 0, %s115
    %s137 = sphi 0, %s139
    %s140 = sphi 0, %s137
    %s141 = sphi 0, %s140
    %s157 = sphi 0, %s141
  $region4: #{up_block_forward.6} parent=0 // loop_header_branch
    %15 = sbr.rel (%p13) target = $region8
  $region5: #{up_block_forward.6} parent=0 // loop_body
    %s17 = ssub.s32 %s12, 1
    %s18 = ssub.s32 %s12, 2
    %s19 = sadd.s32 %s12, 1
    %s20 = ssub.s32 %s12, %s19
    %p21 = scmp.eq.s32.totalorder %s20, 0
    %s23 = sadd.s32 %s22, 1
    %s24 = scalar_select %p21, %s22, %s23
    %p27 = pneg %p21
    %p28 = scmp.eq.s32.totalorder %s12, 1
    %p29 = por %p27, %p28
    %p30 = scmp.ne.s32.totalorder %s22, %s25
    %p31 = scmp.eq.s32.totalorder %s12, 0
    %p32 = por %p30, %p31
    %p33 = scmp.ne.s32.totalorder %s22, %s25
    %p34 = scmp.eq.s32.totalorder %s17, 1
    %p35 = por %p33, %p34
    %p36 = scmp.ne.s32.totalorder %s25, %s26
    %p37 = scmp.eq.s32.totalorder %s17, 0
    %p38 = por %p36, %p37
    %p39 = scmp.ne.s32.totalorder %s25, %s26
    %p40 = scmp.eq.s32.totalorder %s18, 1
    %p41 = por %p39, %p40
    %p43 = scmp.ne.s32.totalorder %s26, %s42
    %p44 = scmp.eq.s32.totalorder %s18, 0
    %p45 = por %p43, %p44
    %s47 = sadd.s32 %s46, 1
    %p50 = scmp.eq.s32.totalorder %s12, 1
    %p51 = scmp.ne.s32.totalorder %s46, %s48
    %p52 = scmp.eq.s32.totalorder %s12, 0
    %p53 = por %p51, %p52
    %p54 = scmp.ne.s32.totalorder %s46, %s48
    %p55 = scmp.eq.s32.totalorder %s17, 1
    %p56 = por %p54, %p55
    %p57 = scmp.ne.s32.totalorder %s48, %s49
    %p58 = scmp.eq.s32.totalorder %s17, 0
    %p59 = por %p57, %p58
    %p60 = scmp.ne.s32.totalorder %s48, %s49
    %p61 = scmp.eq.s32.totalorder %s18, 1
    %p62 = por %p60, %p61
    %p64 = scmp.ne.s32.totalorder %s49, %s63
    %p65 = scmp.eq.s32.totalorder %s18, 0
    %p66 = por %p64, %p65
    %s68 = sadd.s32 %s67, 1
    %p71 = scmp.eq.s32.totalorder %s12, 1
    %p72 = scmp.ne.s32.totalorder %s67, %s69
    %p73 = scmp.eq.s32.totalorder %s12, 0
    %p74 = por %p72, %p73
    %p75 = scmp.ne.s32.totalorder %s67, %s69
    %p76 = scmp.eq.s32.totalorder %s17, 1
    %p77 = por %p75, %p76
    %p78 = scmp.ne.s32.totalorder %s69, %s70
    %p79 = scmp.eq.s32.totalorder %s17, 0
    %p80 = por %p78, %p79
    %p81 = scmp.ne.s32.totalorder %s69, %s70
    %p82 = scmp.eq.s32.totalorder %s18, 1
    %p83 = por %p81, %p82
    %p85 = scmp.ne.s32.totalorder %s70, %s84
    %p86 = scmp.eq.s32.totalorder %s18, 0
    %p87 = por %p85, %p86
    %s89 = sadd.s32 %s88, 1
    %p92 = scmp.eq.s32.totalorder %s12, 1
    %p93 = scmp.ne.s32.totalorder %s88, %s90
    %p94 = scmp.eq.s32.totalorder %s12, 0
    %p95 = por %p93, %p94
    %p96 = scmp.ne.s32.totalorder %s88, %s90
    %p97 = scmp.eq.s32.totalorder %s17, 1
    %p98 = por %p96, %p97
    %p99 = scmp.ne.s32.totalorder %s90, %s91
    %p100 = scmp.eq.s32.totalorder %s17, 0
    %p101 = por %p99, %p100
    %p102 = scmp.ne.s32.totalorder %s90, %s91
    %p103 = scmp.eq.s32.totalorder %s18, 1
    %p104 = por %p102, %p103
    %p106 = scmp.ne.s32.totalorder %s91, %s105
    %p107 = scmp.eq.s32.totalorder %s18, 0
    %p108 = por %p106, %p107
    %s109 = ssub.s32 %s12, %s19
    %p110 = scmp.eq.s32.totalorder %s109, 0
    %s112 = sadd.s32 %s111, 1
    %s113 = scalar_select %p110, %s111, %s112
    %p116 = pneg %p110
    %p117 = scmp.eq.s32.totalorder %s12, 1
    %p118 = por %p116, %p117
    %p119 = scmp.ne.s32.totalorder %s111, %s114
    %p120 = scmp.eq.s32.totalorder %s12, 0
    %p121 = por %p119, %p120
    %p122 = scmp.ne.s32.totalorder %s111, %s114
    %p123 = scmp.eq.s32.totalorder %s17, 1
    %p124 = por %p122, %p123
    %p125 = scmp.ne.s32.totalorder %s114, %s115
    %p126 = scmp.eq.s32.totalorder %s17, 0
    %p127 = por %p125, %p126
    %p128 = scmp.ne.s32.totalorder %s114, %s115
    %p129 = scmp.eq.s32.totalorder %s18, 1
    %p130 = por %p128, %p129
    %p132 = scmp.ne.s32.totalorder %s115, %s131
    %p133 = scmp.eq.s32.totalorder %s18, 0
    %p134 = por %p132, %p133
    %s135 = ssub.s32 %s12, %s19
    %p136 = scmp.eq.s32.totalorder %s135, 0
    %s138 = sadd.s32 %s137, 1
    %s139 = scalar_select %p136, %s137, %s138
    %p142 = pneg %p136
    %p143 = scmp.eq.s32.totalorder %s12, 1
    %p144 = por %p142, %p143
    %p145 = scmp.ne.s32.totalorder %s137, %s140
    %p146 = scmp.eq.s32.totalorder %s12, 0
    %p147 = por %p145, %p146
    %p148 = scmp.ne.s32.totalorder %s137, %s140
    %p149 = scmp.eq.s32.totalorder %s17, 1
    %p150 = por %p148, %p149
    %p151 = scmp.ne.s32.totalorder %s140, %s141
    %p152 = scmp.eq.s32.totalorder %s17, 0
    %p153 = por %p151, %p152
    %p154 = scmp.ne.s32.totalorder %s140, %s141
    %p155 = scmp.eq.s32.totalorder %s18, 1
    %p156 = por %p154, %p155
    %p158 = scmp.ne.s32.totalorder %s141, %s157
    %p159 = scmp.eq.s32.totalorder %s18, 0
    %p160 = por %p158, %p159
    %p161 = scmp.le.s32.totalorder 1, %s12
    %p162 = scmp.lt.s32.totalorder %s12, 3
    %p163 = pnand %p161, %p162
    %p164 = pneg %p163
    // Predicated region
    $region9: #{up_block_forward.6} parent=5 // pred_check
      _
    $region10: #{up_block_forward.6} parent=5 // pred_check_branch
      %166 = sbr.rel (%p163) target = $region12
    $region11: #{up_block_forward.6} parent=5 // pred_region
      %s167 = ssub.s32 %s12, 1
      // Predicated region
      $region13: #{up_block_forward.6} parent=11 // pred_check
        %p168 = pneg %p59
      $region14: #{up_block_forward.6} parent=11 // pred_check_branch
        %170 = sbr.rel (%p168) target = $region16
      $region15: #{up_block_forward.6} parent=11 // pred_region
        _
      $region16: #{up_block_forward.6} parent=11 // pred_fallthru
        _
      // Predicated region
      $region17: #{up_block_forward.6} parent=11 // pred_check
        %p171 = pneg %p80
      $region18: #{up_block_forward.6} parent=11 // pred_check_branch
        %173 = sbr.rel (%p171) target = $region20
      $region19: #{up_block_forward.6} parent=11 // pred_region
        _
      $region20: #{up_block_forward.6} parent=11 // pred_fallthru
        _
      // Predicated region
      $region21: #{up_block_forward.6} parent=11 // pred_check
        %p174 = pneg %p101
      $region22: #{up_block_forward.6} parent=11 // pred_check_branch
        %176 = sbr.rel (%p174) target = $region24
      $region23: #{up_block_forward.6} parent=11 // pred_region
        _
      $region24: #{up_block_forward.6} parent=11 // pred_fallthru
        _
    $region12: #{up_block_forward.6} parent=5 // pred_fallthru
      _
    %p177 = scmp.lt.s32.totalorder %s12, 2
    // Predicated region
    $region25: #{up_block_forward.6} parent=5 // pred_check
      %p178 = pneg %p177
    $region26: #{up_block_forward.6} parent=5 // pred_check_branch
      %180 = sbr.rel (%p178) target = $region28
    $region27: #{up_block_forward.6} parent=5 // pred_region
      // Predicated region
      $region29: #{up_block_forward.6} parent=27 // pred_check
        %p181 = pneg %p32
      $region30: #{up_block_forward.6} parent=27 // pred_check_branch
        %183 = sbr.rel (%p181) target = $region32
      $region31: #{up_block_forward.6} parent=27 // pred_region
        %p184 = scmp.lt.s32.totalorder %s12, 1
        %s185 = scalar_select %p184, %s12, 1
        %s186 = smul.addr %s185, 2
        %s187 = smul.addr %s186, 4
        %s188 = scalar_lea.vmem %s0, %s187
      $region32: #{up_block_forward.6} parent=27 // pred_fallthru
        _
    $region28: #{up_block_forward.6} parent=5 // pred_fallthru
      _
    %p189 = scmp.le.s32.totalorder 1, %s12
    %p190 = scmp.lt.s32.totalorder %s12, 3
    %p191 = pnand %p189, %p190
    %p192 = pneg %p191
    // Predicated region
    $region33: #{up_block_forward.6} parent=5 // pred_check
      _
    $region34: #{up_block_forward.6} parent=5 // pred_check_branch
      %194 = sbr.rel (%p191) target = $region36
    $region35: #{up_block_forward.6} parent=5 // pred_region
      %s195 = ssub.s32 %s12, 1
      %p196 = scmp.lt.s32.totalorder %s17, 1
      %s197 = scalar_select %p196, %s17, 1
      %s198 = smul.addr %s197, 2
      %s199 = smul.addr %s198, 4
      %s200 = scalar_lea.vmem %s0, %s199
      %p201 = pneg %p38
      %p202 = pneg %p35
      %p203 = pneg %p59
      %p204 = pneg %p56
      %p205 = pneg %p80
      %p206 = pneg %p77
      %p207 = pneg %p101
      %p208 = pneg %p98
      %p209 = pneg %p127
      %p210 = pneg %p124
      %p211 = scmp.lt.s32.totalorder %s17, 1
      %s212 = scalar_select %p211, %s17, 1
      %s213 = smul.addr %s212, 2
      %s214 = smul.addr %s213, 4
      %s215 = scalar_lea.vmem %s4, %s214
      %p216 = pneg %p153
      %p217 = pneg %p150
      %p218 = scmp.lt.s32.totalorder %s17, 1
      %s219 = scalar_select %p218, %s17, 1
      %s220 = smul.addr %s219, 2
      %s221 = scalar_lea.vmem %s5, %s220
      %p222 = scmp.lt.s32.totalorder %s17, 1
      %s223 = scalar_select %p222, %s17, 1
      %s224 = smul.addr %s223, 2
      %s225 = smul.addr %s224, 4
      %s226 = scalar_lea.vmem %s0, %s225
      %p227 = scmp.lt.s32.totalorder %s17, 1
      %s228 = scalar_select %p227, %s17, 1
      %s229 = smul.addr %s228, 2
      %s230 = smul.addr %s229, 4
      %s231 = scalar_lea.vmem %s4, %s230
      %p232 = scmp.lt.s32.totalorder %s17, 1
      %s233 = scalar_select %p232, %s17, 1
      %s234 = smul.addr %s233, 2
      %s235 = scalar_lea.vmem %s5, %s234
      %237 = vst [vmem:[#allocation2] sm:$0x1] 0.0
      %238 = vst [vmem:[#allocation2 + $0x11] sm:$0x1] 0.0
      %v239 = vld [vmem:[%s226] sm:$0xf]
      %v240 = vld [vmem:[%s226 + $0x4] sm:$0xf]
      %v241 = vunpack.c.l.bf16 %v239
      %v242 = vunpack.c.l.bf16 %v240
      %v243 = vld [vmem:[%s1] sm:$0x1]
      %v245 = vlaneseq
      %v246 = vshrl.u32 %v245, 7
      %v247 = vsub.s32 0, %v246
      %v248 = vrot.slane %v243, %v247
      %v250 = vmul.f32 %v241, %v248
      %v251 = vmul.f32 %v242, %v248
      %v252 = vld [vmem:[%s2] sm:$0x1]
      %v254 = vlaneseq
      %v255 = vshrl.u32 %v254, 7
      %v256 = vsub.s32 0, %v255
      %v257 = vrot.slane %v252, %v256
      %v259 = vadd.f32 %v250, %v257
      %v260 = vadd.f32 %v251, %v257
      %v261 = vmax.f32 %v259, 0.0
      %v262 = vmax.f32 %v260, 0.0
      %263 = vst [vmem:[#allocation2 + $0x1] sm:$0xff] %v261
      %264 = vst [vmem:[#allocation2 + $0x9] sm:$0xff] %v262
      %v265 = vld [vmem:[#allocation2] sm:$0xff]
      %v266 = vld [vmem:[#allocation2 + $0x8] sm:$0xff]
      %v267 = vpack.c.bf16 %v266, %v265
      %v268 = vld [vmem:[%s3] sm:$0xf]
      %v269 = vld [vmem:[%s3 + $0x4] sm:$0xf]
      %v270 = vld [vmem:[%s3 + $0x8] sm:$0xf]
      %v271 = vld [vmem:[%s3 + $0xc] sm:$0xf]
      %v272 = vld [vmem:[%s3 + $0x10] sm:$0xf]
      %v273 = vld [vmem:[%s3 + $0x14] sm:$0xf]
      %v274 = vld [vmem:[%s3 + $0x18] sm:$0xf]
      %v275 = vld [vmem:[%s3 + $0x1c] sm:$0xf]
      %v276 = vld [vmem:[%s3 + $0x20] sm:$0xf]
      %v277 = vld [vmem:[%s3 + $0x24] sm:$0xf]
      %v278 = vld [vmem:[%s3 + $0x28] sm:$0xf]
      %v279 = vld [vmem:[%s3 + $0x2c] sm:$0xf]
      %v280 = vld [vmem:[%s3 + $0x30] sm:$0xf]
      %v281 = vld [vmem:[%s3 + $0x34] sm:$0xf]
      %v282 = vld [vmem:[%s3 + $0x38] sm:$0xf]
      %v283 = vld [vmem:[%s3 + $0x3c] sm:$0xf]
      %v284 = vld [vmem:[#allocation2 + $0x1] sm:$0xff]
      %v285 = vld [vmem:[#allocation2 + $0x9] sm:$0xff]
      %v286 = vpack.c.bf16 %v285, %v284
      %s287 = scalar_lea.vmem %s3, 64
      %v288 = vld [vmem:[%s287] sm:$0xf]
      %v289 = vld [vmem:[%s287 + $0x4] sm:$0xf]
      %v290 = vld [vmem:[%s287 + $0x8] sm:$0xf]
      %v291 = vld [vmem:[%s287 + $0xc] sm:$0xf]
      %v292 = vld [vmem:[%s287 + $0x10] sm:$0xf]
      %v293 = vld [vmem:[%s287 + $0x14] sm:$0xf]
      %v294 = vld [vmem:[%s287 + $0x18] sm:$0xf]
      %v295 = vld [vmem:[%s287 + $0x1c] sm:$0xf]
      %v296 = vld [vmem:[%s287 + $0x20] sm:$0xf]
      %v297 = vld [vmem:[%s287 + $0x24] sm:$0xf]
      %v298 = vld [vmem:[%s287 + $0x28] sm:$0xf]
      %v299 = vld [vmem:[%s287 + $0x2c] sm:$0xf]
      %v300 = vld [vmem:[%s287 + $0x30] sm:$0xf]
      %v301 = vld [vmem:[%s287 + $0x34] sm:$0xf]
      %v302 = vld [vmem:[%s287 + $0x38] sm:$0xf]
      %v303 = vld [vmem:[%s287 + $0x3c] sm:$0xf]
      %v320 = vunpack.c.l.b16 %v288
      %v321 = vunpack.c.l.b16 %v289
      %v322 = vunpack.c.l.b16 %v290
      %v323 = vunpack.c.l.b16 %v291
      %v324 = vunpack.c.l.b16 %v292
      %v325 = vunpack.c.l.b16 %v293
      %v326 = vunpack.c.l.b16 %v294
      %v327 = vunpack.c.l.b16 %v295
      %v328 = vunpack.c.l.b16 %v296
      %v329 = vunpack.c.l.b16 %v297
      %v330 = vunpack.c.l.b16 %v298
      %v331 = vunpack.c.l.b16 %v299
      %v332 = vunpack.c.l.b16 %v300
      %v333 = vunpack.c.l.b16 %v301
      %v334 = vunpack.c.l.b16 %v302
      %v335 = vunpack.c.l.b16 %v303
      %v336 = vpack.c.b16 %v321, %v320
      %v337 = vpack.c.b16 %v323, %v322
      %v338 = vpack.c.b16 %v325, %v324
      %v339 = vpack.c.b16 %v327, %v326
      %v340 = vpack.c.b16 %v329, %v328
      %v341 = vpack.c.b16 %v331, %v330
      %v342 = vpack.c.b16 %v333, %v332
      %v343 = vpack.c.b16 %v335, %v334
      %352 = vmatprep.subr.bf16.mxu0 0
      %353 = vmatpush1.bf16.msra.mxu0 %v343
      %354 = vmatprep.subr.bf16.mxu0 0
      %355 = vmatpush1.bf16.msra.mxu0 %v342
      %356 = vmatprep.subr.bf16.mxu0 0
      %357 = vmatpush1.bf16.msra.mxu0 %v341
      %358 = vmatprep.subr.bf16.mxu0 0
      %359 = vmatpush1.bf16.msra.mxu0 %v340
      %360 = vmatprep.subr.bf16.mxu0 0
      %361 = vmatpush1.bf16.msra.mxu0 %v339
      %362 = vmatprep.subr.bf16.mxu0 0
      %363 = vmatpush1.bf16.msra.mxu0 %v338
      %364 = vmatprep.subr.bf16.mxu0 0
      %365 = vmatpush1.bf16.msra.mxu0 %v337
      %366 = vmatprep.subr.bf16.mxu0 0
      %367 = vmatpush1.bf16.msra.mxu0 %v336
      %368 = vmatprep.subr.bf16.mxu0 0
      %369 = vmatpush2.bf16.msra.mxu0 0
      %370 = vmatprep.subr.bf16.mxu0 0
      %371 = vmatpush2.bf16.msra.mxu0 0
      %372 = vmatprep.subr.bf16.mxu0 0
      %373 = vmatpush2.bf16.msra.mxu0 0
      %374 = vmatprep.subr.bf16.mxu0 0
      %375 = vmatpush2.bf16.msra.mxu0 0
      %376 = vmatprep.subr.bf16.mxu0 0
      %377 = vmatpush2.bf16.msra.mxu0 0
      %378 = vmatprep.subr.bf16.mxu0 0
      %379 = vmatpush2.bf16.msra.mxu0 0
      %380 = vmatprep.subr.bf16.mxu0 0
      %381 = vmatpush2.bf16.msra.mxu0 0
      %382 = vmatprep.subr.bf16.mxu0 0
      %383 = vmatpush2.bf16.msra.mxu0 0
      %384 = vmatprep.mubr.bf16.mxu0 0
      %385 = vmatmul.mubr.bf16.gmra.mxu0 %v286
      %v386 = vpop.f32.mrf.mxu0
      %v387 = vadd.f32 0.0, %v386
      %v388 = vpop.f32.mrf.mxu0
      %v389 = vpop.f32.mrf.mxu0
      %v390 = vadd.f32 0.0, %v389
      %v391 = vpop.f32.mrf.mxu0
      %392 = vdwg.mxu0
      %v409 = vunpack.c.l.b16 %v268
      %v410 = vunpack.c.l.b16 %v269
      %v411 = vunpack.c.l.b16 %v270
      %v412 = vunpack.c.l.b16 %v271
      %v413 = vunpack.c.l.b16 %v272
      %v414 = vunpack.c.l.b16 %v273
      %v415 = vunpack.c.l.b16 %v274
      %v416 = vunpack.c.l.b16 %v275
      %v417 = vunpack.c.l.b16 %v276
      %v418 = vunpack.c.l.b16 %v277
      %v419 = vunpack.c.l.b16 %v278
      %v420 = vunpack.c.l.b16 %v279
      %v421 = vunpack.c.l.b16 %v280
      %v422 = vunpack.c.l.b16 %v281
      %v423 = vunpack.c.l.b16 %v282
      %v424 = vunpack.c.l.b16 %v283
      %v425 = vpack.c.b16 %v410, %v409
      %v426 = vpack.c.b16 %v412, %v411
      %v427 = vpack.c.b16 %v414, %v413
      %v428 = vpack.c.b16 %v416, %v415
      %v429 = vpack.c.b16 %v418, %v417
      %v430 = vpack.c.b16 %v420, %v419
      %v431 = vpack.c.b16 %v422, %v421
      %v432 = vpack.c.b16 %v424, %v423
      %441 = vmatprep.subr.bf16.mxu0 0
      %442 = vmatpush1.bf16.msra.mxu0 %v432
      %443 = vmatprep.subr.bf16.mxu0 0
      %444 = vmatpush1.bf16.msra.mxu0 %v431
      %445 = vmatprep.subr.bf16.mxu0 0
      %446 = vmatpush1.bf16.msra.mxu0 %v430
      %447 = vmatprep.subr.bf16.mxu0 0
      %448 = vmatpush1.bf16.msra.mxu0 %v429
      %449 = vmatprep.subr.bf16.mxu0 0
      %450 = vmatpush1.bf16.msra.mxu0 %v428
      %451 = vmatprep.subr.bf16.mxu0 0
      %452 = vmatpush1.bf16.msra.mxu0 %v427
      %453 = vmatprep.subr.bf16.mxu0 0
      %454 = vmatpush1.bf16.msra.mxu0 %v426
      %455 = vmatprep.subr.bf16.mxu0 0
      %456 = vmatpush1.bf16.msra.mxu0 %v425
      %457 = vmatprep.subr.bf16.mxu0 0
      %458 = vmatpush2.bf16.msra.mxu0 0
      %459 = vmatprep.subr.bf16.mxu0 0
      %460 = vmatpush2.bf16.msra.mxu0 0
      %461 = vmatprep.subr.bf16.mxu0 0
      %462 = vmatpush2.bf16.msra.mxu0 0
      %463 = vmatprep.subr.bf16.mxu0 0
      %464 = vmatpush2.bf16.msra.mxu0 0
      %465 = vmatprep.subr.bf16.mxu0 0
      %466 = vmatpush2.bf16.msra.mxu0 0
      %467 = vmatprep.subr.bf16.mxu0 0
      %468 = vmatpush2.bf16.msra.mxu0 0
      %469 = vmatprep.subr.bf16.mxu0 0
      %470 = vmatpush2.bf16.msra.mxu0 0
      %471 = vmatprep.subr.bf16.mxu0 0
      %472 = vmatpush2.bf16.msra.mxu0 0
      %473 = vmatprep.mubr.bf16.mxu0 0
      %474 = vmatmul.mubr.bf16.gmra.mxu0 %v267
      %v475 = vpop.f32.mrf.mxu0
      %v476 = vadd.f32 %v387, %v475
      %v477 = vpop.f32.mrf.mxu0
      %v478 = vpop.f32.mrf.mxu0
      %v479 = vadd.f32 %v390, %v478
      %v480 = vpop.f32.mrf.mxu0
      %481 = vdwg.mxu0
      %v482 = vld [vmem:[#allocation2 + $0x2] sm:$0xff]
      %v483 = vld [vmem:[#allocation2 + $0xa] sm:$0xff]
      %v484 = vpack.c.bf16 %v483, %v482
      %s485 = scalar_lea.vmem %s3, 128
      %v486 = vld [vmem:[%s485] sm:$0xf]
      %v487 = vld [vmem:[%s485 + $0x4] sm:$0xf]
      %v488 = vld [vmem:[%s485 + $0x8] sm:$0xf]
      %v489 = vld [vmem:[%s485 + $0xc] sm:$0xf]
      %v490 = vld [vmem:[%s485 + $0x10] sm:$0xf]
      %v491 = vld [vmem:[%s485 + $0x14] sm:$0xf]
      %v492 = vld [vmem:[%s485 + $0x18] sm:$0xf]
      %v493 = vld [vmem:[%s485 + $0x1c] sm:$0xf]
      %v494 = vld [vmem:[%s485 + $0x20] sm:$0xf]
      %v495 = vld [vmem:[%s485 + $0x24] sm:$0xf]
      %v496 = vld [vmem:[%s485 + $0x28] sm:$0xf]
      %v497 = vld [vmem:[%s485 + $0x2c] sm:$0xf]
      %v498 = vld [vmem:[%s485 + $0x30] sm:$0xf]
      %v499 = vld [vmem:[%s485 + $0x34] sm:$0xf]
      %v500 = vld [vmem:[%s485 + $0x38] sm:$0xf]
      %v501 = vld [vmem:[%s485 + $0x3c] sm:$0xf]
      %v518 = vunpack.c.l.b16 %v486
      %v519 = vunpack.c.l.b16 %v487
      %v520 = vunpack.c.l.b16 %v488
      %v521 = vunpack.c.l.b16 %v489
      %v522 = vunpack.c.l.b16 %v490
      %v523 = vunpack.c.l.b16 %v491
      %v524 = vunpack.c.l.b16 %v492
      %v525 = vunpack.c.l.b16 %v493
      %v526 = vunpack.c.l.b16 %v494
      %v527 = vunpack.c.l.b16 %v495
      %v528 = vunpack.c.l.b16 %v496
      %v529 = vunpack.c.l.b16 %v497
      %v530 = vunpack.c.l.b16 %v498
      %v531 = vunpack.c.l.b16 %v499
      %v532 = vunpack.c.l.b16 %v500
      %v533 = vunpack.c.l.b16 %v501
      %v534 = vpack.c.b16 %v519, %v518
      %v535 = vpack.c.b16 %v521, %v520
      %v536 = vpack.c.b16 %v523, %v522
      %v537 = vpack.c.b16 %v525, %v524
      %v538 = vpack.c.b16 %v527, %v526
      %v539 = vpack.c.b16 %v529, %v528
      %v540 = vpack.c.b16 %v531, %v530
      %v541 = vpack.c.b16 %v533, %v532
      %550 = vmatprep.subr.bf16.mxu0 0
      %551 = vmatpush1.bf16.msra.mxu0 %v541
      %552 = vmatprep.subr.bf16.mxu0 0
      %553 = vmatpush1.bf16.msra.mxu0 %v540
      %554 = vmatprep.subr.bf16.mxu0 0
      %555 = vmatpush1.bf16.msra.mxu0 %v539
      %556 = vmatprep.subr.bf16.mxu0 0
      %557 = vmatpush1.bf16.msra.mxu0 %v538
      %558 = vmatprep.subr.bf16.mxu0 0
      %559 = vmatpush1.bf16.msra.mxu0 %v537
      %560 = vmatprep.subr.bf16.mxu0 0
      %561 = vmatpush1.bf16.msra.mxu0 %v536
      %562 = vmatprep.subr.bf16.mxu0 0
      %563 = vmatpush1.bf16.msra.mxu0 %v535
      %564 = vmatprep.subr.bf16.mxu0 0
      %565 = vmatpush1.bf16.msra.mxu0 %v534
      %566 = vmatprep.subr.bf16.mxu0 0
      %567 = vmatpush2.bf16.msra.mxu0 0
      %568 = vmatprep.subr.bf16.mxu0 0
      %569 = vmatpush2.bf16.msra.mxu0 0
      %570 = vmatprep.subr.bf16.mxu0 0
      %571 = vmatpush2.bf16.msra.mxu0 0
      %572 = vmatprep.subr.bf16.mxu0 0
      %573 = vmatpush2.bf16.msra.mxu0 0
      %574 = vmatprep.subr.bf16.mxu0 0
      %575 = vmatpush2.bf16.msra.mxu0 0
      %576 = vmatprep.subr.bf16.mxu0 0
      %577 = vmatpush2.bf16.msra.mxu0 0
      %578 = vmatprep.subr.bf16.mxu0 0
      %579 = vmatpush2.bf16.msra.mxu0 0
      %580 = vmatprep.subr.bf16.mxu0 0
      %581 = vmatpush2.bf16.msra.mxu0 0
      %582 = vmatprep.mubr.bf16.mxu0 0
      %583 = vmatmul.mubr.bf16.gmra.mxu0 %v484
      %v584 = vpop.f32.mrf.mxu0
      %v585 = vadd.f32 0.0, %v584
      %v586 = vpop.f32.mrf.mxu0
      %v587 = vpop.f32.mrf.mxu0
      %v588 = vadd.f32 0.0, %v587
      %v589 = vpop.f32.mrf.mxu0
      %590 = vdwg.mxu0
      %v591 = vadd.f32 %v476, %v585
      %v592 = vadd.f32 %v479, %v588
      %v593 = vpack.c.bf16 %v592, %v591
      %v595 = vunpack.c.l.b16 %v593
      %v596 = vunpack.c.h.b16 %v593
      %v597 = vpack.c.b16 %v595, %v595
      %v598 = vpack.c.b16 %v596, %v596
      %601 = vst [vmem:[%s231] sm:$0xf] %v597
      %602 = vst [vmem:[%s231 + $0x4] sm:$0xf] %v598
      %v603 = vadd.f32 %v591, %v592
      %v604 = vrot.slane %v603, 4
      %v605 = vadd.f32 %v603, %v604
      %v606 = vrot.slane %v605, 2
      %v607 = vadd.f32 %v605, %v606
      %v608 = vrot.slane %v607, 1
      %v609 = vadd.f32 %v607, %v608
      %v610 = vmul.f32 %v591, %v591
      %v611 = vmul.f32 %v592, %v592
      %v612 = vadd.f32 %v610, %v611
      %v613 = vrot.slane %v612, 4
      %v614 = vadd.f32 %v612, %v613
      %v615 = vrot.slane %v614, 2
      %v616 = vadd.f32 %v614, %v615
      %v617 = vrot.slane %v616, 1
      %v618 = vadd.f32 %v616, %v617
      %vm619 = vcmask 1040384
      %v620 = vsel %vm619, %v609, %v618
      %621 = vst [vmem:[%s235] sm:$0x3] %v620
      %p622 = scmp.lt.s32.totalorder %s17, 1
      %s623 = scalar_select %p622, %s17, 1
      %s624 = smul.addr %s623, 2
      %s625 = smul.addr %s624, 4
      %s626 = scalar_lea.vmem %s4, %s625
      %p627 = scmp.lt.s32.totalorder %s17, 1
      %s628 = scalar_select %p627, %s17, 1
      %s629 = smul.addr %s628, 2
      %s630 = scalar_lea.vmem %s5, %s629
      // Predicated region
      $region37: #{up_block_forward.6} parent=35 // pred_check
        %p631 = pneg %p124
      $region38: #{up_block_forward.6} parent=35 // pred_check_branch
        %633 = sbr.rel (%p631) target = $region40
      $region39: #{up_block_forward.6} parent=35 // pred_region
        _
      $region40: #{up_block_forward.6} parent=35 // pred_fallthru
        _
      // Predicated region
      $region41: #{up_block_forward.6} parent=35 // pred_check
        %p634 = pneg %p150
      $region42: #{up_block_forward.6} parent=35 // pred_check_branch
        %636 = sbr.rel (%p634) target = $region44
      $region43: #{up_block_forward.6} parent=35 // pred_region
        _
      $region44: #{up_block_forward.6} parent=35 // pred_fallthru
        _
    $region36: #{up_block_forward.6} parent=5 // pred_fallthru
      _
    %p637 = scmp.le.s32.totalorder 2, %s12
    // Predicated region
    $region45: #{up_block_forward.6} parent=5 // pred_check
      %p638 = pneg %p637
    $region46: #{up_block_forward.6} parent=5 // pred_check_branch
      %640 = sbr.rel (%p638) target = $region48
    $region47: #{up_block_forward.6} parent=5 // pred_region
      %s641 = ssub.s32 %s12, 2
      // Predicated region
      $region49: #{up_block_forward.6} parent=47 // pred_check
        %p642 = pneg %p130
      $region50: #{up_block_forward.6} parent=47 // pred_check_branch
        %644 = sbr.rel (%p642) target = $region52
      $region51: #{up_block_forward.6} parent=47 // pred_region
        %p645 = scmp.lt.s32.totalorder %s18, 1
        %s646 = scalar_select %p645, %s18, 1
        %s647 = smul.addr %s646, 2
        %s648 = smul.addr %s647, 4
        %s649 = scalar_lea.vmem %s4, %s648
      $region52: #{up_block_forward.6} parent=47 // pred_fallthru
        _
      // Predicated region
      $region53: #{up_block_forward.6} parent=47 // pred_check
        %p650 = pneg %p156
      $region54: #{up_block_forward.6} parent=47 // pred_check_branch
        %652 = sbr.rel (%p650) target = $region56
      $region55: #{up_block_forward.6} parent=47 // pred_region
        %p653 = scmp.lt.s32.totalorder %s18, 1
        %s654 = scalar_select %p653, %s18, 1
        %s655 = smul.addr %s654, 2
        %s656 = scalar_lea.vmem %s5, %s655
      $region56: #{up_block_forward.6} parent=47 // pred_fallthru
        _
    $region48: #{up_block_forward.6} parent=5 // pred_fallthru
      _
  $region6: #{up_block_forward.6} parent=0 // loop_footer
    %s16 = sadd.s32 1, %s12
  $region7: #{up_block_forward.6} parent=0 // loop_footer_branch
    %11 = sbr.rel target = $region3
  $region8: #{up_block_forward.6} parent=0 // loop_exit
    _

// kernel: up_block_forward.9
$region0: #{up_block_forward.9}
  #allocation0 [shape = 'u32[]', space=smem, size = 0x4, offset = 0x4, fixed_abs, tag = 'smem constant byte address 0x4 - core index']
  #allocation1 [shape = 'u32[144,128]{1,0:T(1,128)}', space=vmem, size = 0x12000, scoped, tag = 'internal scratch']
  %s0 = inlined_call_operand.vmem [shape: bf16[32,128], index: 0, kind: input, shape index: {}]
  %s1 = inlined_call_operand.vmem [shape: f32[1,128], index: 1, kind: input, shape index: {}]
  %s2 = inlined_call_operand.vmem [shape: f32[1,128], index: 2, kind: input, shape index: {}]
  %s3 = inlined_call_operand.vmem [shape: f32[32,128], index: 3, kind: output, shape index: {}]
  %s4 = sld [smem:[#allocation0]]
  $region22: #{up_block_forward.9} parent=0
    _
  %s6 = ssub.s32 1, %s4
  %s7 = scalar_select 0, %s6, %s4
  // Predicated region
  $region2: #{up_block_forward.9} parent=0 // pred_check
    _
  $region3: #{up_block_forward.9} parent=0 // pred_check_branch
    %9 = sbr.rel (0) target = $region5
  $region4: #{up_block_forward.9} parent=0 // pred_region
    _
  $region5: #{up_block_forward.9} parent=0 // pred_fallthru
    _
  // Predicated region
  $region6: #{up_block_forward.9} parent=0 // pred_check
    _
  $region7: #{up_block_forward.9} parent=0 // pred_check_branch
    %11 = sbr.rel (0) target = $region9
  $region8: #{up_block_forward.9} parent=0 // pred_region
    _
  $region9: #{up_block_forward.9} parent=0 // pred_fallthru
    _
  // Predicated region
  $region10: #{up_block_forward.9} parent=0 // pred_check
    _
  $region11: #{up_block_forward.9} parent=0 // pred_check_branch
    %13 = sbr.rel (0) target = $region13
  $region12: #{up_block_forward.9} parent=0 // pred_region
    _
  $region13: #{up_block_forward.9} parent=0 // pred_fallthru
    _
  %v14 = vld [vmem:[%s0] sm:$0xf]
  %v15 = vld [vmem:[%s0 + $0x4] sm:$0xf]
  %v16 = vld [vmem:[%s0 + $0x8] sm:$0xf]
  %v17 = vld [vmem:[%s0 + $0xc] sm:$0xf]
  %v18 = vunpack.c.l.bf16 %v14
  %v19 = vunpack.c.l.bf16 %v15
  %v20 = vunpack.c.l.bf16 %v16
  %v21 = vunpack.c.l.bf16 %v17
  %v22 = vld [vmem:[%s1] sm:$0x1]
  %v24 = vlaneseq
  %v25 = vshrl.u32 %v24, 7
  %v26 = vsub.s32 0, %v25
  %v27 = vrot.slane %v22, %v26
  %v29 = vmul.f32 %v18, %v27
  %v30 = vmul.f32 %v19, %v27
  %v31 = vmul.f32 %v20, %v27
  %v32 = vmul.f32 %v21, %v27
  %v33 = vld [vmem:[%s2] sm:$0x1]
  %v35 = vlaneseq
  %v36 = vshrl.u32 %v35, 7
  %v37 = vsub.s32 0, %v36
  %v38 = vrot.slane %v33, %v37
  %v40 = vadd.f32 %v29, %v38
  %v41 = vadd.f32 %v30, %v38
  %v42 = vadd.f32 %v31, %v38
  %v43 = vadd.f32 %v32, %v38
  %44 = vst [vmem:[%s3] sm:$0xff] %v40
  %45 = vst [vmem:[%s3 + $0x8] sm:$0xff] %v41
  %46 = vst [vmem:[%s3 + $0x10] sm:$0xff] %v42
  %47 = vst [vmem:[%s3 + $0x18] sm:$0xff] %v43
  // Predicated region
  $region14: #{up_block_forward.9} parent=0 // pred_check
    _
  $region15: #{up_block_forward.9} parent=0 // pred_check_branch
    %49 = sbr.rel (0) target = $region17
  $region16: #{up_block_forward.9} parent=0 // pred_region
    _
  $region17: #{up_block_forward.9} parent=0 // pred_fallthru
    _
  // Predicated region
  $region18: #{up_block_forward.9} parent=0 // pred_check
    _
  $region19: #{up_block_forward.9} parent=0 // pred_check_branch
    %51 = sbr.rel (0) target = $region21
  $region20: #{up_block_forward.9} parent=0 // pred_region
    _
  $region21: #{up_block_forward.9} parent=0 // pred_fallthru
    _

</llo_original>
